<compile_context>
chip_gen: v7x
topology: tpu7x:2x2x1
jax: 0.10.0
libtpu: 0.0.40
codegen_flags: <defaults>
</compile_context>

<pallas_src>
from functools import partial

import jax
import jax.numpy as jnp
from jax import lax
from jax.experimental import pallas as pl
from jax.experimental.pallas import tpu as pltpu


GEM_EPS = 1e-6


# ---------------------------------------------------------------------------
# Fused kernel: conv1x1 stem + ReLU + GeM accumulation over HW tiles, with the
# fc head applied on the last tile of each batch.
#
# grid = (B, n_hw_tiles)
#   x_ref      : (1, C, tile)  f32   image tile, spatial on lanes
#   w_ref      : (F, C)        f32   conv weight (resident)
#   b_ref      : (F, 1)        f32   conv bias   (resident)
#   w_img_ref  : (F, nc)       f32   fc weight slice for image features (resident)
#   meta_ref   : (1, 1, nc)    f32   per-sample folded meta logits + fc bias
#   out_ref    : (1, 1, nc)    f32   per-sample logits
#   acc_ref    : (F, 128)      f32   VMEM scratch: lane-dense sum over HW of y**p
# ---------------------------------------------------------------------------
def netmeta2d_fused_kernel(x_ref, w_ref, b_ref, w_img_ref, meta_ref,
                           out_ref, acc_ref, *,
                           gem_p, inv_hw, num_hw_tiles, chunk, conv_on_mxu):
    t = pl.program_id(1)
    C = x_ref.shape[1]
    tile = x_ref.shape[2]

    @pl.when(t == 0)
    def _init():
        acc_ref[...] = jnp.zeros_like(acc_ref)

    # Hoisted, loop-invariant weight loads (tiny).
    b_col = b_ref[...]                                          # (F, 1)
    if conv_on_mxu:
        w16 = w_ref[...].astype(jnp.bfloat16)                   # (F, C) bf16
        w_cols = None
    else:
        w_cols = [w_ref[:, c:c + 1] for c in range(C)]          # C x (F, 1)

    def accumulate(start, width):
        """Stem + ReLU + y**p for x[:, start:start+width]; add into acc_ref."""
        x_c = x_ref[0, :, pl.ds(start, width)]                  # (C, width) f32
        if conv_on_mxu:
            # bf16 MXU benchmark path (cast happens in-kernel, f32 accumulate).
            y = jnp.dot(w16, x_c.astype(jnp.bfloat16),
                        preferred_element_type=jnp.float32) + b_col
        else:
            # Unrolled channel outer-product on the VPU (K = C is tiny).
            y = b_col + w_cols[0] * x_c[0:1, :]
            for c in range(1, C):
                y = y + w_cols[c] * x_c[c:c + 1, :]
        # ReLU then clamp(min=eps) == max(y, eps) since eps > 0.
        y = jnp.maximum(y, GEM_EPS)
        if gem_p == 3.0:
            yp = y * y * y                                      # VPU-only fast path
        else:
            yp = jnp.exp(gem_p * jnp.log(y))                    # general p (EUP)
        # Lane-dense accumulation: plain vadds of 128-lane slabs into acc.
        n_slabs = width // 128
        tail = width % 128
        if n_slabs > 0:
            s = yp[:, 0:128]
            for j in range(1, n_slabs):
                s = s + yp[:, j * 128:(j + 1) * 128]
            acc_ref[...] += s
        if tail > 0:                                            # non-128 HW only
            off = n_slabs * 128
            acc_ref[:, 0:1] += jnp.sum(yp[:, off:off + tail],
                                       axis=1, keepdims=True)

    # Walk the big DMA'd tile in fixed-size sub-chunks (compute granularity).
    n_full = tile // chunk
    rem = tile % chunk
    if n_full > 0:
        def chunk_body(j, carry):
            accumulate(pl.multiple_of(j * chunk, 128), chunk)
            return carry
        lax.fori_loop(0, n_full, chunk_body, 0,
                      unroll=True if n_full <= 8 else 8)
    if rem > 0:
        accumulate(n_full * chunk, rem)

    @pl.when(t == num_hw_tiles - 1)
    def _finalize():
        # Single cross-lane reduction per batch: (F, 128) -> (F, 1).
        pooled = jnp.sum(acc_ref[...], axis=1, keepdims=True) * inv_hw
        # pooled >= eps**p > 0, so log is safe; tiny (F, 1) tensor.
        feat = jnp.exp(jnp.log(pooled) * (1.0 / gem_p))          # GeM feature (F, 1)
        # fc head on the image features: reduce over F -> (1, nc), lane-dense.
        logits = jnp.sum(feat * w_img_ref[...], axis=0, keepdims=True)
        # + folded meta-embedding logits + fc bias.  Multisample dropout is
        # identity in eval, so the mean of 5 fc passes equals this single pass.
        out_ref[0] = logits + meta_ref[0]                        # (1, nc)


# ---------------------------------------------------------------------------
# Tiling helpers (generation-aware)
# ---------------------------------------------------------------------------
def _vmem_budget_bytes():
    """Conservative per-call VMEM budget for the image double buffer."""
    cap = 64 * 1024 * 1024          # assume the smallest (v7x per-TC) if unknown
    try:
        info = pltpu.get_tpu_info()
        cap = int(getattr(info, "vmem_capacity_bytes", cap))
    except Exception:
        pass
    return min(cap // 4, 24 * 1024 * 1024)


def _pick_hw_tile(hw, c_in, target_lanes, vmem_budget_bytes):
    """Spatial tile (lanes) for the (1, C, tile) image block.

    Prefers one big block (few grid steps); otherwise the largest 128-multiple
    divisor of hw that fits both the lane target and the double-buffered VMEM
    budget.
    """
    bytes_per_lane = 2 * c_in * 4            # double-buffered f32 column
    cap = max(128, vmem_budget_bytes // bytes_per_lane)
    limit = max(128, min(int(target_lanes), cap))
    if hw <= limit or hw % 128 != 0:
        # Single full-extent block.  For hw % 128 != 0 this is also the only
        # way to avoid padded lanes polluting the GeM mean; with small C it
        # still fits VMEM comfortably (the in-kernel chunk loop bounds the
        # (F, chunk) intermediate regardless of tile size).
        return hw
    m = hw // 128
    best = 128
    for k in range(min(m, limit // 128), 0, -1):
        if m % k == 0:
            best = k * 128
            break
    # Pathological divisor structure (e.g. hw = 128 * prime): prefer one big
    # block over thousands of tiny grid steps if it fits the budget.
    if best * 16 < limit and hw * bytes_per_lane <= vmem_budget_bytes:
        return hw
    return best


# ---------------------------------------------------------------------------
# Wrapper
# ---------------------------------------------------------------------------
def net_meta_2d_forward(params, img, age, sex, ant, *,
                        hw_tile_target=65536, chunk=512, conv_on_mxu=False):
    square_tta = False
    if img.ndim == 5 and img.shape[0] == 1:                # square-TTA branch
        img, age, sex, ant = img[0], age[0], sex[0], ant[0]
        square_tta = True

    B, C, H, W = img.shape
    HW = H * W
    conv_w = params["conv_w"].astype(jnp.float32)          # (F, C)
    F_dim = conv_w.shape[0]
    meta_dim = params["age_tab"].shape[1]
    num_classes = params["fc_b"].shape[-1]
    # GeM p is treated as a static hyper-parameter (init 3.0 in torch).
    # TODO(synk): if a checkpoint supplies p as a traced array, feed it as an
    # SMEM scalar input instead of baking it in at trace time.
    gem_p = float(params["gem_p"])

    # NCHW -> (B, C, H*W): free reshape, stays f32 (no wrapper-side cast, no
    # extra HBM round-trip for the dominant tensor).
    img_r = img.reshape(B, C, HW)
    conv_b = params["conv_b"].reshape(F_dim, 1).astype(jnp.float32)

    # Fold the meta path: fc(concat([feat, age, sex, ant])) ==
    #   feat @ W_img + age_tab[age] @ W_age + ... + b
    # The table @ W products are tiny (<=10 x nc) -> plain XLA + row gathers.
    hp = jax.lax.Precision.HIGHEST
    w = params["fc_w"]                                     # (F + 3*meta, nc)
    w_img = w[:F_dim].astype(jnp.float32)                  # (F, nc)
    w_age = w[F_dim:F_dim + meta_dim]
    w_sex = w[F_dim + meta_dim:F_dim + 2 * meta_dim]
    w_ant = w[F_dim + 2 * meta_dim:]
    age_lt = jnp.dot(params["age_tab"], w_age, precision=hp)   # (10, nc)
    sex_lt = jnp.dot(params["sex_tab"], w_sex, precision=hp)   # (2, nc)
    ant_lt = jnp.dot(params["ant_tab"], w_ant, precision=hp)   # (6, nc)
    meta_bias = (age_lt[age.astype(jnp.int32)]
                 + sex_lt[sex.astype(jnp.int32)]
                 + ant_lt[ant.astype(jnp.int32)]
                 + params["fc_b"].reshape(1, num_classes))     # (B, nc)
    meta_bias = meta_bias.astype(jnp.float32).reshape(B, 1, num_classes)

    budget = _vmem_budget_bytes()
    tile = _pick_hw_tile(HW, C, hw_tile_target, budget)
    n_hw = HW // tile
    chunk = max(128, (int(chunk) // 128) * 128)            # 128-aligned sub-chunk

    itemsize = img_r.dtype.itemsize
    cost = pl.CostEstimate(
        flops=int(B * HW * F_dim * (2 * C + 3) + 2 * B * F_dim * num_classes),
        transcendentals=int(2 * B * F_dim),
        bytes_accessed=int(B * C * HW * itemsize
                           + F_dim * (C + 1 + num_classes) * 4
                           + 2 * B * num_classes * 4),
    )
    vmem_needed = 2 * C * tile * itemsize + F_dim * 128 * 4 + 4 * 1024 * 1024
    vmem_limit = int(min(max(32 * 1024 * 1024, vmem_needed), 48 * 1024 * 1024))

    out = pl.pallas_call(
        partial(netmeta2d_fused_kernel,
                gem_p=gem_p, inv_hw=1.0 / HW, num_hw_tiles=n_hw,
                chunk=chunk, conv_on_mxu=conv_on_mxu),
        out_shape=jax.ShapeDtypeStruct((B, 1, num_classes), jnp.float32),
        grid_spec=pltpu.PrefetchScalarGridSpec(
            num_scalar_prefetch=0,
            grid=(B, n_hw),
            in_specs=[
                pl.BlockSpec((1, C, tile), lambda b, t: (b, 0, t)),          # image tile
                pl.BlockSpec((F_dim, C), lambda b, t: (0, 0)),               # conv w
                pl.BlockSpec((F_dim, 1), lambda b, t: (0, 0)),               # conv b
                pl.BlockSpec((F_dim, num_classes), lambda b, t: (0, 0)),     # fc w (img slice)
                pl.BlockSpec((1, 1, num_classes), lambda b, t: (b, 0, 0)),   # meta + bias
            ],
            out_specs=pl.BlockSpec((1, 1, num_classes), lambda b, t: (b, 0, 0)),
            scratch_shapes=[pltpu.VMEM((F_dim, 128), jnp.float32)],          # GeM accum
        ),
        compiler_params=pltpu.CompilerParams(
            dimension_semantics=("parallel", "arbitrary"),   # batch || , HW reduce
            vmem_limit_bytes=vmem_limit,
        ),
        cost_estimate=cost,
    )(img_r, conv_w, conv_b, w_img, meta_bias)

    logits = out.reshape(B, num_classes)
    result = logits if num_classes > 1 else logits[:, 0]
    if square_tta:
        result = result.mean(0)[None]
    return result


# ---------------------------------------------------------------------------
# Pure-JAX reference (numerical sanity check)
# ---------------------------------------------------------------------------
def _reference_forward(params, img, age, sex, ant):
    B, C, H, W = img.shape
    p = params["gem_p"]
    hp = jax.lax.Precision.HIGHEST
    x = jnp.einsum("bchw,fc->bfhw", img, params["conv_w"], precision=hp) \
        + params["conv_b"][None, :, None, None]
    x = jnp.maximum(x, 0.0)
    x = jnp.maximum(x, GEM_EPS) ** p
    feat = jnp.mean(x.reshape(B, -1, H * W), axis=-1) ** (1.0 / p)   # (B, F)
    full = jnp.concatenate(
        [feat,
         params["age_tab"][age],
         params["sex_tab"][sex],
         params["ant_tab"][ant]], axis=1)
    return jnp.dot(full, params["fc_w"], precision=hp) + params["fc_b"]


# ---------------------------------------------------------------------------
# Deterministic parameter init + example run
# ---------------------------------------------------------------------------
def make_params(c_in=4, dim_feats=128, meta_dim=32, num_classes=6):
    keys = jax.random.split(jax.random.PRNGKey(0), 7)
    return {
        "conv_w": 0.1 * jax.random.normal(keys[0], (dim_feats, c_in), jnp.float32),
        "conv_b": 0.01 * jax.random.normal(keys[1], (dim_feats,), jnp.float32),
        "gem_p": 3.0,                                   # GeM p (learnable in torch, init 3.0)
        "age_tab": jax.random.normal(keys[2], (10, meta_dim), jnp.float32),
        "sex_tab": jax.random.normal(keys[3], (2, meta_dim), jnp.float32),
        "ant_tab": jax.random.normal(keys[4], (6, meta_dim), jnp.float32),
        "fc_w": 0.05 * jax.random.normal(
            keys[5], (dim_feats + 3 * meta_dim, num_classes), jnp.float32),
        "fc_b": 0.01 * jax.random.normal(keys[6], (1, num_classes), jnp.float32),
    }


if __name__ == "__main__":
    B, C, H, W = 2, 4, 32, 32
    params = make_params(c_in=C, dim_feats=128, meta_dim=32, num_classes=6)

    dkeys = jax.random.split(jax.random.PRNGKey(0), 4)
    img = jax.random.normal(dkeys[0], (B, C, H, W), jnp.float32)      # NCHW
    age = jax.random.randint(dkeys[1], (B,), 0, 10, jnp.int32)
    sex = jax.random.randint(dkeys[2], (B,), 0, 2, jnp.int32)
    ant = jax.random.randint(dkeys[3], (B,), 0, 6, jnp.int32)

    ref = _reference_forward(params, img, age, sex, ant)

    # 1) Default path: single full-HW tile per batch + in-kernel chunk loop.
    out = jax.block_until_ready(net_meta_2d_forward(params, img, age, sex, ant))
    assert out.shape == (B, 6) and out.dtype == jnp.float32
    assert jnp.allclose(out, ref, rtol=2e-3, atol=2e-3), (out, ref)

    # 2) Forced multi-tile grid: exercises init / accumulate / finalize across
    #    HW grid steps.
    out2 = jax.block_until_ready(
        net_meta_2d_forward(params, img, age, sex, ant, hw_tile_target=512))
    assert jnp.allclose(out2, ref, rtol=2e-3, atol=2e-3), (out2, ref)

    # 3) Non-128-multiple spatial size: full-HW block + remainder-chunk path.
    img3 = jax.random.normal(dkeys[0], (B, C, 30, 30), jnp.float32)
    ref3 = _reference_forward(params, img3, age, sex, ant)
    out3 = jax.block_until_ready(net_meta_2d_forward(params, img3, age, sex, ant))
    assert jnp.allclose(out3, ref3, rtol=2e-3, atol=2e-3), (out3, ref3)

    # 4) Optional bf16 MXU stem path (benchmark alternative); loose tolerance.
    out4 = jax.block_until_ready(
        net_meta_2d_forward(params, img, age, sex, ant, conv_on_mxu=True))
    assert jnp.allclose(out4, ref, rtol=5e-2, atol=5e-2), (out4, ref)

    print("KERNEL_OK")
</pallas_src>

<mosaic_0001>
module attributes {stable_mosaic.version = 11 : i64} {
  func.func @netmeta2d_fused_kernel(%arg0: i32, %arg1: i32, %arg2: memref<1x4x1024xf32, #tpu.memory_space<vmem>>, %arg3: memref<128x4xf32, #tpu.memory_space<vmem>>, %arg4: memref<128x1xf32, #tpu.memory_space<vmem>>, %arg5: memref<128x6xf32, #tpu.memory_space<vmem>>, %arg6: memref<1x1x6xf32, #tpu.memory_space<vmem>>, %arg7: memref<1x1x6xf32, #tpu.memory_space<vmem>>, %arg8: memref<128x128xf32, #tpu.memory_space<vmem>>) attributes {dimension_semantics = [#tpu.dimension_semantics<parallel>, #tpu.dimension_semantics<arbitrary>], iteration_bounds = array<i64: 2, 1>, scalar_prefetch = 0 : i64, scratch_operands = 1 : i64, tpu.core_type = #tpu.core_type<tc>, window_params = [{transform_indices = @transform_0, window_bounds = array<i64: 1, 4, 1024>}, {pipeline_mode = #tpu.pipeline_mode<synchronous>, transform_indices = @transform_1, window_bounds = array<i64: 128, 4>}, {pipeline_mode = #tpu.pipeline_mode<synchronous>, transform_indices = @transform_2, window_bounds = array<i64: 128, 1>}, {pipeline_mode = #tpu.pipeline_mode<synchronous>, transform_indices = @transform_3, window_bounds = array<i64: 128, 6>}, {transform_indices = @transform_4, window_bounds = array<i64: 1, 1, 6>}, {transform_indices = @transform_5, window_bounds = array<i64: 1, 1, 6>}]} {
    %c0_i32 = arith.constant 0 : i32
    %0 = arith.cmpi eq, %arg1, %c0_i32 : i32
    %1 = arith.extui %0 : i1 to i32
    %c0_i32_0 = arith.constant 0 : i32
    %2 = arith.cmpi ne, %1, %c0_i32_0 : i32
    scf.if %2 {
      %cst_24 = arith.constant 0.000000e+00 : f32
      %91 = vector.broadcast %cst_24 : f32 to vector<128x128xf32>
      %c0_25 = arith.constant 0 : index
      %c0_26 = arith.constant 0 : index
      %92 = vector.load %arg8[%c0_25, %c0_26] : memref<128x128xf32, #tpu.memory_space<vmem>>, vector<128x128xf32>
      tpu.vector_store %arg8[%c0_25, %c0_26], %91 {strides = array<i32>} : memref<128x128xf32, #tpu.memory_space<vmem>>, vector<128x128xf32>,
    } else {
    }
    %c0 = arith.constant 0 : index
    %c0_1 = arith.constant 0 : index
    %3 = vector.load %arg4[%c0, %c0_1] : memref<128x1xf32, #tpu.memory_space<vmem>>, vector<128x1xf32>
    %c0_2 = arith.constant 0 : index
    %c0_3 = arith.constant 0 : index
    %4 = vector.load %arg3[%c0_2, %c0_3] : memref<128x4xf32, #tpu.memory_space<vmem>>, vector<128x1xf32>
    %c0_4 = arith.constant 0 : index
    %c1 = arith.constant 1 : index
    %5 = vector.load %arg3[%c0_4, %c1] : memref<128x4xf32, #tpu.memory_space<vmem>>, vector<128x1xf32>
    %c0_5 = arith.constant 0 : index
    %c2 = arith.constant 2 : index
    %6 = vector.load %arg3[%c0_5, %c2] : memref<128x4xf32, #tpu.memory_space<vmem>>, vector<128x1xf32>
    %c0_6 = arith.constant 0 : index
    %c3 = arith.constant 3 : index
    %7 = vector.load %arg3[%c0_6, %c3] : memref<128x4xf32, #tpu.memory_space<vmem>>, vector<128x1xf32>
    %c0_i32_7 = arith.constant 0 : i32
    %c512_i32 = arith.constant 512 : i32
    %8 = arith.muli %c0_i32_7, %c512_i32 : i32
    %9 = tpu.assume_multiple %8, 128 : i32
    %c0_8 = arith.constant 0 : index
    %c0_9 = arith.constant 0 : index
    %10 = arith.index_cast %9 : i32 to index
    %11 = vector.load %arg2[%c0_8, %c0_9, %10] : memref<1x4x1024xf32, #tpu.memory_space<vmem>>, vector<1x4x512xf32>
    %12 = vector.shape_cast %11 : vector<1x4x512xf32> to vector<4x512xf32>
    %13 = vector.extract_strided_slice %12 {offsets = [0, 0], sizes = [1, 512], strides = [1, 1]} : vector<4x512xf32> to vector<1x512xf32>
    %14 = vector.broadcast %4 : vector<128x1xf32> to vector<128x512xf32>
    %15 = vector.broadcast %13 : vector<1x512xf32> to vector<128x512xf32>
    %16 = arith.mulf %14, %15 : vector<128x512xf32>
    %17 = vector.broadcast %3 : vector<128x1xf32> to vector<128x512xf32>
    %18 = arith.addf %17, %16 : vector<128x512xf32>
    %19 = vector.extract_strided_slice %12 {offsets = [1, 0], sizes = [1, 512], strides = [1, 1]} : vector<4x512xf32> to vector<1x512xf32>
    %20 = vector.broadcast %5 : vector<128x1xf32> to vector<128x512xf32>
    %21 = vector.broadcast %19 : vector<1x512xf32> to vector<128x512xf32>
    %22 = arith.mulf %20, %21 : vector<128x512xf32>
    %23 = arith.addf %18, %22 : vector<128x512xf32>
    %24 = vector.extract_strided_slice %12 {offsets = [2, 0], sizes = [1, 512], strides = [1, 1]} : vector<4x512xf32> to vector<1x512xf32>
    %25 = vector.broadcast %6 : vector<128x1xf32> to vector<128x512xf32>
    %26 = vector.broadcast %24 : vector<1x512xf32> to vector<128x512xf32>
    %27 = arith.mulf %25, %26 : vector<128x512xf32>
    %28 = arith.addf %23, %27 : vector<128x512xf32>
    %29 = vector.extract_strided_slice %12 {offsets = [3, 0], sizes = [1, 512], strides = [1, 1]} : vector<4x512xf32> to vector<1x512xf32>
    %30 = vector.broadcast %7 : vector<128x1xf32> to vector<128x512xf32>
    %31 = vector.broadcast %29 : vector<1x512xf32> to vector<128x512xf32>
    %32 = arith.mulf %30, %31 : vector<128x512xf32>
    %33 = arith.addf %28, %32 : vector<128x512xf32>
    %cst = arith.constant 9.99999997E-7 : f32
    %34 = vector.broadcast %cst : f32 to vector<128x512xf32>
    %35 = arith.maximumf %33, %34 : vector<128x512xf32>
    %36 = arith.mulf %35, %35 : vector<128x512xf32>
    %37 = arith.mulf %36, %35 : vector<128x512xf32>
    %38 = vector.extract_strided_slice %37 {offsets = [0, 0], sizes = [128, 128], strides = [1, 1]} : vector<128x512xf32> to vector<128x128xf32>
    %39 = vector.extract_strided_slice %37 {offsets = [0, 128], sizes = [128, 128], strides = [1, 1]} : vector<128x512xf32> to vector<128x128xf32>
    %40 = arith.addf %38, %39 : vector<128x128xf32>
    %41 = vector.extract_strided_slice %37 {offsets = [0, 256], sizes = [128, 128], strides = [1, 1]} : vector<128x512xf32> to vector<128x128xf32>
    %42 = arith.addf %40, %41 : vector<128x128xf32>
    %43 = vector.extract_strided_slice %37 {offsets = [0, 384], sizes = [128, 128], strides = [1, 1]} : vector<128x512xf32> to vector<128x128xf32>
    %44 = arith.addf %42, %43 : vector<128x128xf32>
    %c0_10 = arith.constant 0 : index
    %c0_11 = arith.constant 0 : index
    %45 = vector.load %arg8[%c0_10, %c0_11] : memref<128x128xf32, #tpu.memory_space<vmem>>, vector<128x128xf32>
    %46 = arith.addf %45, %44 : vector<128x128xf32>
    %c0_12 = arith.constant 0 : index
    %c0_13 = arith.constant 0 : index
    %47 = vector.load %arg8[%c0_12, %c0_13] : memref<128x128xf32, #tpu.memory_space<vmem>>, vector<128x128xf32>
    tpu.vector_store %arg8[%c0_12, %c0_13], %46 {strides = array<i32>} : memref<128x128xf32, #tpu.memory_space<vmem>>, vector<128x128xf32>,
    %c1_i32 = arith.constant 1 : i32
    %c512_i32_14 = arith.constant 512 : i32
    %48 = arith.muli %c1_i32, %c512_i32_14 : i32
    %49 = tpu.assume_multiple %48, 128 : i32
    %c0_15 = arith.constant 0 : index
    %c0_16 = arith.constant 0 : index
    %50 = arith.index_cast %49 : i32 to index
    %51 = vector.load %arg2[%c0_15, %c0_16, %50] : memref<1x4x1024xf32, #tpu.memory_space<vmem>>, vector<1x4x512xf32>
    %52 = vector.shape_cast %51 : vector<1x4x512xf32> to vector<4x512xf32>
    %53 = vector.extract_strided_slice %52 {offsets = [0, 0], sizes = [1, 512], strides = [1, 1]} : vector<4x512xf32> to vector<1x512xf32>
    %54 = vector.broadcast %4 : vector<128x1xf32> to vector<128x512xf32>
    %55 = vector.broadcast %53 : vector<1x512xf32> to vector<128x512xf32>
    %56 = arith.mulf %54, %55 : vector<128x512xf32>
    %57 = vector.broadcast %3 : vector<128x1xf32> to vector<128x512xf32>
    %58 = arith.addf %57, %56 : vector<128x512xf32>
    %59 = vector.extract_strided_slice %52 {offsets = [1, 0], sizes = [1, 512], strides = [1, 1]} : vector<4x512xf32> to vector<1x512xf32>
    %60 = vector.broadcast %5 : vector<128x1xf32> to vector<128x512xf32>
    %61 = vector.broadcast %59 : vector<1x512xf32> to vector<128x512xf32>
    %62 = arith.mulf %60, %61 : vector<128x512xf32>
    %63 = arith.addf %58, %62 : vector<128x512xf32>
    %64 = vector.extract_strided_slice %52 {offsets = [2, 0], sizes = [1, 512], strides = [1, 1]} : vector<4x512xf32> to vector<1x512xf32>
    %65 = vector.broadcast %6 : vector<128x1xf32> to vector<128x512xf32>
    %66 = vector.broadcast %64 : vector<1x512xf32> to vector<128x512xf32>
    %67 = arith.mulf %65, %66 : vector<128x512xf32>
    %68 = arith.addf %63, %67 : vector<128x512xf32>
    %69 = vector.extract_strided_slice %52 {offsets = [3, 0], sizes = [1, 512], strides = [1, 1]} : vector<4x512xf32> to vector<1x512xf32>
    %70 = vector.broadcast %7 : vector<128x1xf32> to vector<128x512xf32>
    %71 = vector.broadcast %69 : vector<1x512xf32> to vector<128x512xf32>
    %72 = arith.mulf %70, %71 : vector<128x512xf32>
    %73 = arith.addf %68, %72 : vector<128x512xf32>
    %cst_17 = arith.constant 9.99999997E-7 : f32
    %74 = vector.broadcast %cst_17 : f32 to vector<128x512xf32>
    %75 = arith.maximumf %73, %74 : vector<128x512xf32>
    %76 = arith.mulf %75, %75 : vector<128x512xf32>
    %77 = arith.mulf %76, %75 : vector<128x512xf32>
    %78 = vector.extract_strided_slice %77 {offsets = [0, 0], sizes = [128, 128], strides = [1, 1]} : vector<128x512xf32> to vector<128x128xf32>
    %79 = vector.extract_strided_slice %77 {offsets = [0, 128], sizes = [128, 128], strides = [1, 1]} : vector<128x512xf32> to vector<128x128xf32>
    %80 = arith.addf %78, %79 : vector<128x128xf32>
    %81 = vector.extract_strided_slice %77 {offsets = [0, 256], sizes = [128, 128], strides = [1, 1]} : vector<128x512xf32> to vector<128x128xf32>
    %82 = arith.addf %80, %81 : vector<128x128xf32>
    %83 = vector.extract_strided_slice %77 {offsets = [0, 384], sizes = [128, 128], strides = [1, 1]} : vector<128x512xf32> to vector<128x128xf32>
    %84 = arith.addf %82, %83 : vector<128x128xf32>
    %c0_18 = arith.constant 0 : index
    %c0_19 = arith.constant 0 : index
    %85 = vector.load %arg8[%c0_18, %c0_19] : memref<128x128xf32, #tpu.memory_space<vmem>>, vector<128x128xf32>
    %86 = arith.addf %85, %84 : vector<128x128xf32>
    %c0_20 = arith.constant 0 : index
    %c0_21 = arith.constant 0 : index
    %87 = vector.load %arg8[%c0_20, %c0_21] : memref<128x128xf32, #tpu.memory_space<vmem>>, vector<128x128xf32>
    tpu.vector_store %arg8[%c0_20, %c0_21], %86 {strides = array<i32>} : memref<128x128xf32, #tpu.memory_space<vmem>>, vector<128x128xf32>,
    %c2_i32 = arith.constant 2 : i32
    %c0_i32_22 = arith.constant 0 : i32
    %88 = arith.cmpi eq, %arg1, %c0_i32_22 : i32
    %89 = arith.extui %88 : i1 to i32
    %c0_i32_23 = arith.constant 0 : i32
    %90 = arith.cmpi ne, %89, %c0_i32_23 : i32
    scf.if %90 {
      %c0_24 = arith.constant 0 : index
      %c0_25 = arith.constant 0 : index
      %91 = vector.load %arg8[%c0_24, %c0_25] : memref<128x128xf32, #tpu.memory_space<vmem>>, vector<128x128xf32>
      %cst_26 = arith.constant dense<0.000000e+00> : vector<128xf32>
      %92 = vector.multi_reduction <add>, %91, %cst_26 [1] : vector<128x128xf32> to vector<128xf32>
      %93 = vector.shape_cast %92 : vector<128xf32> to vector<128x1xf32>
      %cst_27 = arith.constant 9.765625E-4 : f32
      %94 = vector.broadcast %cst_27 : f32 to vector<128x1xf32>
      %95 = arith.mulf %93, %94 : vector<128x1xf32>
      %96 = math.log %95 : vector<128x1xf32>
      %cst_28 = arith.constant 0.333333343 : f32
      %97 = vector.broadcast %cst_28 : f32 to vector<128x1xf32>
      %98 = arith.mulf %96, %97 : vector<128x1xf32>
      %99 = math.exp %98 : vector<128x1xf32>
      %c0_29 = arith.constant 0 : index
      %c0_30 = arith.constant 0 : index
      %100 = vector.load %arg5[%c0_29, %c0_30] : memref<128x6xf32, #tpu.memory_space<vmem>>, vector<128x6xf32>
      %101 = vector.broadcast %99 : vector<128x1xf32> to vector<128x6xf32>
      %102 = arith.mulf %101, %100 : vector<128x6xf32>
      %cst_31 = arith.constant dense<0.000000e+00> : vector<6xf32>
      %103 = vector.multi_reduction <add>, %102, %cst_31 [0] : vector<128x6xf32> to vector<6xf32>
      %104 = vector.shape_cast %103 : vector<6xf32> to vector<1x6xf32>
      %c0_32 = arith.constant 0 : index
      %c0_33 = arith.constant 0 : index
      %c0_34 = arith.constant 0 : index
      %105 = vector.load %arg6[%c0_32, %c0_33, %c0_34] : memref<1x1x6xf32, #tpu.memory_space<vmem>>, vector<1x1x6xf32>
      %106 = vector.shape_cast %105 : vector<1x1x6xf32> to vector<1x6xf32>
      %107 = arith.addf %104, %106 : vector<1x6xf32>
      %c0_35 = arith.constant 0 : index
      %c0_36 = arith.constant 0 : index
      %c0_37 = arith.constant 0 : index
      %108 = vector.load %arg7[%c0_35, %c0_36, %c0_37] : memref<1x1x6xf32, #tpu.memory_space<vmem>>, vector<1x1x6xf32>
      %109 = vector.shape_cast %108 : vector<1x1x6xf32> to vector<1x6xf32>
      %110 = vector.shape_cast %107 : vector<1x6xf32> to vector<1x1x6xf32>
      tpu.vector_store %arg7[%c0_35, %c0_36, %c0_37], %110 {strides = array<i32>} : memref<1x1x6xf32, #tpu.memory_space<vmem>>, vector<1x1x6xf32>,
    } else {
    }
    return
  }
  func.func @transform_0(%arg0: i32, %arg1: i32) -> (i32, i32, i32) {
    %c0_i32 = arith.constant 0 : i32
    %c0_i32_0 = arith.constant 0 : i32
    return %arg0, %c0_i32, %arg1 : i32, i32, i32
  }
  func.func @transform_1(%arg0: i32, %arg1: i32) -> (i32, i32) {
    %c0_i32 = arith.constant 0 : i32
    %c0_i32_0 = arith.constant 0 : i32
    %c0_i32_1 = arith.constant 0 : i32
    return %c0_i32, %c0_i32_0 : i32, i32
  }
  func.func @transform_2(%arg0: i32, %arg1: i32) -> (i32, i32) {
    %c0_i32 = arith.constant 0 : i32
    %c0_i32_0 = arith.constant 0 : i32
    %c0_i32_1 = arith.constant 0 : i32
    return %c0_i32, %c0_i32_0 : i32, i32
  }
  func.func @transform_3(%arg0: i32, %arg1: i32) -> (i32, i32) {
    %c0_i32 = arith.constant 0 : i32
    %c0_i32_0 = arith.constant 0 : i32
    %c0_i32_1 = arith.constant 0 : i32
    return %c0_i32, %c0_i32_0 : i32, i32
  }
  func.func @transform_4(%arg0: i32, %arg1: i32) -> (i32, i32, i32) {
    %c0_i32 = arith.constant 0 : i32
    %c0_i32_0 = arith.constant 0 : i32
    %c0_i32_1 = arith.constant 0 : i32
    return %arg0, %c0_i32, %c0_i32_0 : i32, i32, i32
  }
  func.func @transform_5(%arg0: i32, %arg1: i32) -> (i32, i32, i32) {
    %c0_i32 = arith.constant 0 : i32
    %c0_i32_0 = arith.constant 0 : i32
    %c0_i32_1 = arith.constant 0 : i32
    return %arg0, %c0_i32, %c0_i32_0 : i32, i32, i32
  }
}

</mosaic_0001>

<llo_original>
// kernel: tpu_custom_call.1
$region0: #{tpu_custom_call.1}
  #allocation0 [shape = 'u32[]', space=smem, size = 0x4, offset = 0x4, fixed_abs, tag = 'smem constant byte address 0x4 - core index']
  #allocation1 [shape = 'u32[144,128]{1,0:T(1,128)}', space=vmem, size = 0x12000, scoped, tag = 'internal scratch']
  #allocation2 [shape = 'f32[128,128]{1,0:T(8,128)}', space=vmem, size = 0x10000, scoped, tag = 'scratch operand']
  %s0 = inlined_call_operand.vmem [shape: f32[2,4,1024], index: 0, kind: input, shape index: {}]
  %s1 = inlined_call_operand.vmem [shape: f32[128,4], index: 1, kind: input, shape index: {}]
  %s2 = inlined_call_operand.vmem [shape: f32[128,1], index: 2, kind: input, shape index: {}]
  %s3 = inlined_call_operand.vmem [shape: f32[128,6], index: 3, kind: input, shape index: {}]
  %s4 = inlined_call_operand.vmem [shape: f32[2,1,6], index: 4, kind: input, shape index: {}]
  %s5 = inlined_call_operand.hbm [shape: f32[2,1,6], index: 5, kind: output, shape index: {}]
  %s6 = sld [smem:[#allocation0]]
  $region61: #{tpu_custom_call.1} parent=0
    _
  %s8 = ssub.s32 1, %s6
  %s9 = scalar_select 0, %s8, %s6
  $region1: #{tpu_custom_call.1} parent=0
    #allocation3 [shape = 'u8[1024]{0}', space=vmem, size = 0x400, scoped, tag = 'output window, operand 0']
    #allocation4 [shape = 's32[2]{0}', space=sflag, size = 0x8, scoped, tag = 'scoped memory for tpu_custom_call.1']
    %10 = vsyncpa [#allocation4], 0
    %s11 = scalar_lea.sflag [#allocation4], 1
    %12 = vsyncpa %s11, 0
    loop: start=0, step=1, limit=4
    $region2: #{tpu_custom_call.1} parent=1 // loop_pre_header
      _
    $region3: #{tpu_custom_call.1} parent=1 // loop_header
      %s14 = sphi 0, %s18
      %p15 = scmp.ge.s32.totalorder %s14, 4
      %s21 = sphi 0, %s33
      %s22 = sphi 0, %s29
      %s23 = sphi 0, %s21
      %s24 = sphi 0, %s22
      %s25 = sphi 0, %s23
      %s26 = sphi 0, %s24
      %s38 = sphi 0, %s40
      %s41 = sphi 0, %s38
      %s42 = sphi 0, %s41
      %s58 = sphi 0, %s42
      %s62 = sphi 0, %s62
      %s64 = sphi 0, %s62
      %s65 = sphi 0, %s64
      %s79 = sphi 0, %s65
      %s83 = sphi 0, %s83
      %s85 = sphi 0, %s83
      %s86 = sphi 0, %s85
      %s100 = sphi 0, %s86
      %s104 = sphi 0, %s104
      %s106 = sphi 0, %s104
      %s107 = sphi 0, %s106
      %s121 = sphi 0, %s107
      %s127 = sphi 0, %s129
      %s130 = sphi 0, %s127
      %s131 = sphi 0, %s130
      %s147 = sphi 0, %s131
      %s153 = sphi 0, %s155
      %s156 = sphi 0, %s153
      %s157 = sphi 0, %s156
      %s173 = sphi 0, %s157
    $region4: #{tpu_custom_call.1} parent=1 // loop_header_branch
      %17 = sbr.rel (%p15) target = $region8
    $region5: #{tpu_custom_call.1} parent=1 // loop_body
      %s19 = ssub.s32 %s14, 1
      %s20 = ssub.s32 %s14, 2
      %s27 = sadd.s32 1, %s22
      %p28 = scmp.ge.s32.totalorder %s27, 1
      %s29 = scalar_select %p28, 0, %s27
      %s30 = sadd.s32 1, %s21
      %s31 = scalar_select %p28, %s30, %s21
      %p32 = scmp.ge.s32.totalorder %s31, 2
      %s33 = scalar_select %p32, 0, %s31
      %s34 = ssub.s32 %s21, %s33
      %s35 = ssub.s32 %s22, %s29
      %s36 = sor.u32 %s34, %s35
      %p37 = scmp.eq.s32.totalorder %s36, 0
      %s39 = sadd.s32 %s38, 1
      %s40 = scalar_select %p37, %s38, %s39
      %p43 = pneg %p37
      %p44 = scmp.eq.s32.totalorder %s14, 1
      %p45 = por %p43, %p44
      %p46 = scmp.ne.s32.totalorder %s38, %s41
      %p47 = scmp.eq.s32.totalorder %s14, 0
      %p48 = por %p46, %p47
      %p49 = scmp.ne.s32.totalorder %s38, %s41
      %p50 = scmp.eq.s32.totalorder %s19, 1
      %p51 = por %p49, %p50
      %p52 = scmp.ne.s32.totalorder %s41, %s42
      %p53 = scmp.eq.s32.totalorder %s19, 0
      %p54 = por %p52, %p53
      %p55 = scmp.ne.s32.totalorder %s41, %s42
      %p56 = scmp.eq.s32.totalorder %s20, 1
      %p57 = por %p55, %p56
      %p59 = scmp.ne.s32.totalorder %s42, %s58
      %p60 = scmp.eq.s32.totalorder %s20, 0
      %p61 = por %p59, %p60
      %s63 = sadd.s32 %s62, 1
      %p66 = scmp.eq.s32.totalorder %s14, 1
      %p67 = scmp.ne.s32.totalorder %s62, %s64
      %p68 = scmp.eq.s32.totalorder %s14, 0
      %p69 = por %p67, %p68
      %p70 = scmp.ne.s32.totalorder %s62, %s64
      %p71 = scmp.eq.s32.totalorder %s19, 1
      %p72 = por %p70, %p71
      %p73 = scmp.ne.s32.totalorder %s64, %s65
      %p74 = scmp.eq.s32.totalorder %s19, 0
      %p75 = por %p73, %p74
      %p76 = scmp.ne.s32.totalorder %s64, %s65
      %p77 = scmp.eq.s32.totalorder %s20, 1
      %p78 = por %p76, %p77
      %p80 = scmp.ne.s32.totalorder %s65, %s79
      %p81 = scmp.eq.s32.totalorder %s20, 0
      %p82 = por %p80, %p81
      %s84 = sadd.s32 %s83, 1
      %p87 = scmp.eq.s32.totalorder %s14, 1
      %p88 = scmp.ne.s32.totalorder %s83, %s85
      %p89 = scmp.eq.s32.totalorder %s14, 0
      %p90 = por %p88, %p89
      %p91 = scmp.ne.s32.totalorder %s83, %s85
      %p92 = scmp.eq.s32.totalorder %s19, 1
      %p93 = por %p91, %p92
      %p94 = scmp.ne.s32.totalorder %s85, %s86
      %p95 = scmp.eq.s32.totalorder %s19, 0
      %p96 = por %p94, %p95
      %p97 = scmp.ne.s32.totalorder %s85, %s86
      %p98 = scmp.eq.s32.totalorder %s20, 1
      %p99 = por %p97, %p98
      %p101 = scmp.ne.s32.totalorder %s86, %s100
      %p102 = scmp.eq.s32.totalorder %s20, 0
      %p103 = por %p101, %p102
      %s105 = sadd.s32 %s104, 1
      %p108 = scmp.eq.s32.totalorder %s14, 1
      %p109 = scmp.ne.s32.totalorder %s104, %s106
      %p110 = scmp.eq.s32.totalorder %s14, 0
      %p111 = por %p109, %p110
      %p112 = scmp.ne.s32.totalorder %s104, %s106
      %p113 = scmp.eq.s32.totalorder %s19, 1
      %p114 = por %p112, %p113
      %p115 = scmp.ne.s32.totalorder %s106, %s107
      %p116 = scmp.eq.s32.totalorder %s19, 0
      %p117 = por %p115, %p116
      %p118 = scmp.ne.s32.totalorder %s106, %s107
      %p119 = scmp.eq.s32.totalorder %s20, 1
      %p120 = por %p118, %p119
      %p122 = scmp.ne.s32.totalorder %s107, %s121
      %p123 = scmp.eq.s32.totalorder %s20, 0
      %p124 = por %p122, %p123
      %s125 = ssub.s32 %s21, %s33
      %p126 = scmp.eq.s32.totalorder %s125, 0
      %s128 = sadd.s32 %s127, 1
      %s129 = scalar_select %p126, %s127, %s128
      %p132 = pneg %p126
      %p133 = scmp.eq.s32.totalorder %s14, 1
      %p134 = por %p132, %p133
      %p135 = scmp.ne.s32.totalorder %s127, %s130
      %p136 = scmp.eq.s32.totalorder %s14, 0
      %p137 = por %p135, %p136
      %p138 = scmp.ne.s32.totalorder %s127, %s130
      %p139 = scmp.eq.s32.totalorder %s19, 1
      %p140 = por %p138, %p139
      %p141 = scmp.ne.s32.totalorder %s130, %s131
      %p142 = scmp.eq.s32.totalorder %s19, 0
      %p143 = por %p141, %p142
      %p144 = scmp.ne.s32.totalorder %s130, %s131
      %p145 = scmp.eq.s32.totalorder %s20, 1
      %p146 = por %p144, %p145
      %p148 = scmp.ne.s32.totalorder %s131, %s147
      %p149 = scmp.eq.s32.totalorder %s20, 0
      %p150 = por %p148, %p149
      %s151 = ssub.s32 %s21, %s33
      %p152 = scmp.eq.s32.totalorder %s151, 0
      %s154 = sadd.s32 %s153, 1
      %s155 = scalar_select %p152, %s153, %s154
      %p158 = pneg %p152
      %p159 = scmp.eq.s32.totalorder %s14, 1
      %p160 = por %p158, %p159
      %p161 = scmp.ne.s32.totalorder %s153, %s156
      %p162 = scmp.eq.s32.totalorder %s14, 0
      %p163 = por %p161, %p162
      %p164 = scmp.ne.s32.totalorder %s153, %s156
      %p165 = scmp.eq.s32.totalorder %s19, 1
      %p166 = por %p164, %p165
      %p167 = scmp.ne.s32.totalorder %s156, %s157
      %p168 = scmp.eq.s32.totalorder %s19, 0
      %p169 = por %p167, %p168
      %p170 = scmp.ne.s32.totalorder %s156, %s157
      %p171 = scmp.eq.s32.totalorder %s20, 1
      %p172 = por %p170, %p171
      %p174 = scmp.ne.s32.totalorder %s157, %s173
      %p175 = scmp.eq.s32.totalorder %s20, 0
      %p176 = por %p174, %p175
      %p177 = scmp.le.s32.totalorder 1, %s14
      %p178 = scmp.lt.s32.totalorder %s14, 3
      %p179 = pnand %p177, %p178
      %p180 = pneg %p179
      // Predicated region
      $region9: #{tpu_custom_call.1} parent=5 // pred_check
        _
      $region10: #{tpu_custom_call.1} parent=5 // pred_check_branch
        %182 = sbr.rel (%p179) target = $region12
      $region11: #{tpu_custom_call.1} parent=5 // pred_region
        %s183 = ssub.s32 %s14, 1
        // Predicated region
        $region13: #{tpu_custom_call.1} parent=11 // pred_check
          %p184 = pneg %p75
        $region14: #{tpu_custom_call.1} parent=11 // pred_check_branch
          %186 = sbr.rel (%p184) target = $region16
        $region15: #{tpu_custom_call.1} parent=11 // pred_region
          _
        $region16: #{tpu_custom_call.1} parent=11 // pred_fallthru
          _
        // Predicated region
        $region17: #{tpu_custom_call.1} parent=11 // pred_check
          %p187 = pneg %p96
        $region18: #{tpu_custom_call.1} parent=11 // pred_check_branch
          %189 = sbr.rel (%p187) target = $region20
        $region19: #{tpu_custom_call.1} parent=11 // pred_region
          _
        $region20: #{tpu_custom_call.1} parent=11 // pred_fallthru
          _
        // Predicated region
        $region21: #{tpu_custom_call.1} parent=11 // pred_check
          %p190 = pneg %p117
        $region22: #{tpu_custom_call.1} parent=11 // pred_check_branch
          %192 = sbr.rel (%p190) target = $region24
        $region23: #{tpu_custom_call.1} parent=11 // pred_region
          _
        $region24: #{tpu_custom_call.1} parent=11 // pred_fallthru
          _
      $region12: #{tpu_custom_call.1} parent=5 // pred_fallthru
        _
      %p193 = scmp.lt.s32.totalorder %s14, 2
      // Predicated region
      $region25: #{tpu_custom_call.1} parent=5 // pred_check
        %p194 = pneg %p193
      $region26: #{tpu_custom_call.1} parent=5 // pred_check_branch
        %196 = sbr.rel (%p194) target = $region28
      $region27: #{tpu_custom_call.1} parent=5 // pred_region
        // Predicated region
        $region29: #{tpu_custom_call.1} parent=27 // pred_check
          %p197 = pneg %p48
        $region30: #{tpu_custom_call.1} parent=27 // pred_check_branch
          %199 = sbr.rel (%p197) target = $region32
        $region31: #{tpu_custom_call.1} parent=27 // pred_region
          %s200 = smul.u32 8, %s22
          %p201 = scmp.lt.s32.totalorder %s21, 1
          %s202 = scalar_select %p201, %s21, 1
          %p203 = scmp.lt.s32.totalorder %s200, 7
          %s204 = scalar_select %p203, %s200, 7
          %s205 = smul.addr %s202, 8
          %s206 = sadd.s32 %s204, %s205
          %s207 = smul.addr %s206, 4
          %s208 = scalar_lea.vmem %s0, %s207
          %s209 = smul.u32 8, %s22
        $region32: #{tpu_custom_call.1} parent=27 // pred_fallthru
          _
        // Predicated region
        $region33: #{tpu_custom_call.1} parent=27 // pred_check
          %p210 = pneg %p137
        $region34: #{tpu_custom_call.1} parent=27 // pred_check_branch
          %212 = sbr.rel (%p210) target = $region36
        $region35: #{tpu_custom_call.1} parent=27 // pred_region
          %p213 = scmp.lt.s32.totalorder %s21, 1
          %s214 = scalar_select %p213, %s21, 1
          %s215 = scalar_lea.vmem %s4, %s214
        $region36: #{tpu_custom_call.1} parent=27 // pred_fallthru
          _
      $region28: #{tpu_custom_call.1} parent=5 // pred_fallthru
        _
      %p216 = scmp.le.s32.totalorder 1, %s14
      %p217 = scmp.lt.s32.totalorder %s14, 3
      %p218 = pnand %p216, %p217
      %p219 = pneg %p218
      // Predicated region
      $region37: #{tpu_custom_call.1} parent=5 // pred_check
        _
      $region38: #{tpu_custom_call.1} parent=5 // pred_check_branch
        %221 = sbr.rel (%p218) target = $region40
      $region39: #{tpu_custom_call.1} parent=5 // pred_region
        %s222 = ssub.s32 %s14, 1
        %s223 = smul.u32 8, %s24
        %p224 = scmp.lt.s32.totalorder %s23, 1
        %s225 = scalar_select %p224, %s23, 1
        %p226 = scmp.lt.s32.totalorder %s223, 7
        %s227 = scalar_select %p226, %s223, 7
        %s228 = smul.addr %s225, 8
        %s229 = sadd.s32 %s227, %s228
        %s230 = smul.addr %s229, 4
        %s231 = scalar_lea.vmem %s0, %s230
        %p232 = pneg %p54
        %p233 = pneg %p51
        %p234 = pneg %p75
        %p235 = pneg %p72
        %p236 = pneg %p96
        %p237 = pneg %p93
        %p238 = pneg %p117
        %p239 = pneg %p114
        %p240 = scmp.lt.s32.totalorder %s23, 1
        %s241 = scalar_select %p240, %s23, 1
        %s242 = scalar_lea.vmem %s4, %s241
        %p243 = pneg %p143
        %p244 = pneg %p140
        %p245 = pneg %p169
        %p246 = pneg %p166
        %s247 = sand.u32 %s156, 1
        %s248 = scalar_lea.sflag [#allocation4], %s247
        %s249 = sand.u32 %s156, 1
        %s250 = scalar_lea.vmem [#allocation3], %s249
        %s251 = smul.u32 8, %s24
        %p252 = scmp.lt.s32.totalorder %s23, 1
        %s253 = scalar_select %p252, %s23, 1
        %p254 = scmp.lt.s32.totalorder %s251, 7
        %s255 = scalar_select %p254, %s251, 7
        %s256 = smul.addr %s253, 8
        %s257 = sadd.s32 %s255, %s256
        %s258 = smul.addr %s257, 4
        %s259 = scalar_lea.vmem %s0, %s258
        %s260 = smul.u32 8, %s24
        %p261 = scmp.lt.s32.totalorder %s23, 1
        %s262 = scalar_select %p261, %s23, 1
        %s263 = scalar_lea.vmem %s4, %s262
        %p264 = scmp.eq.s32.totalorder %s24, 0
        // Predicated region
        $region41: #{tpu_custom_call.1} parent=39 // pred_check
          %p265 = pneg %p264
        $region42: #{tpu_custom_call.1} parent=39 // pred_check_branch
          %267 = sbr.rel (%p265) target = $region44
        $region43: #{tpu_custom_call.1} parent=39 // pred_region
          %268 = vst [vmem:[#allocation2] sm:$0xff] 0.0
          %269 = vst [vmem:[#allocation2 + $0x8] sm:$0xff] 0.0
          %270 = vst [vmem:[#allocation2 + $0x10] sm:$0xff] 0.0
          %271 = vst [vmem:[#allocation2 + $0x18] sm:$0xff] 0.0
          %272 = vst [vmem:[#allocation2 + $0x20] sm:$0xff] 0.0
          %273 = vst [vmem:[#allocation2 + $0x28] sm:$0xff] 0.0
          %274 = vst [vmem:[#allocation2 + $0x30] sm:$0xff] 0.0
          %275 = vst [vmem:[#allocation2 + $0x38] sm:$0xff] 0.0
          %276 = vst [vmem:[#allocation2 + $0x40] sm:$0xff] 0.0
          %277 = vst [vmem:[#allocation2 + $0x48] sm:$0xff] 0.0
          %278 = vst [vmem:[#allocation2 + $0x50] sm:$0xff] 0.0
          %279 = vst [vmem:[#allocation2 + $0x58] sm:$0xff] 0.0
          %280 = vst [vmem:[#allocation2 + $0x60] sm:$0xff] 0.0
          %281 = vst [vmem:[#allocation2 + $0x68] sm:$0xff] 0.0
          %282 = vst [vmem:[#allocation2 + $0x70] sm:$0xff] 0.0
          %283 = vst [vmem:[#allocation2 + $0x78] sm:$0xff] 0.0
        $region44: #{tpu_custom_call.1} parent=39 // pred_fallthru
          _
        %v284 = vld [vmem:[%s2] sm:$0xff]
        %v285 = vld [vmem:[%s2 + $0x8] sm:$0xff]
        %v286 = vld [vmem:[%s2 + $0x10] sm:$0xff]
        %v287 = vld [vmem:[%s2 + $0x18] sm:$0xff]
        %v288 = vld [vmem:[%s2 + $0x20] sm:$0xff]
        %v289 = vld [vmem:[%s2 + $0x28] sm:$0xff]
        %v290 = vld [vmem:[%s2 + $0x30] sm:$0xff]
        %v291 = vld [vmem:[%s2 + $0x38] sm:$0xff]
        %v292 = vld [vmem:[%s2 + $0x40] sm:$0xff]
        %v293 = vld [vmem:[%s2 + $0x48] sm:$0xff]
        %v294 = vld [vmem:[%s2 + $0x50] sm:$0xff]
        %v295 = vld [vmem:[%s2 + $0x58] sm:$0xff]
        %v296 = vld [vmem:[%s2 + $0x60] sm:$0xff]
        %v297 = vld [vmem:[%s2 + $0x68] sm:$0xff]
        %v298 = vld [vmem:[%s2 + $0x70] sm:$0xff]
        %v299 = vld [vmem:[%s2 + $0x78] sm:$0xff]
        %v300 = vld [vmem:[%s1] sm:$0xff]
        %v301 = vld [vmem:[%s1 + $0x8] sm:$0xff]
        %v302 = vld [vmem:[%s1 + $0x10] sm:$0xff]
        %v303 = vld [vmem:[%s1 + $0x18] sm:$0xff]
        %v304 = vld [vmem:[%s1 + $0x20] sm:$0xff]
        %v305 = vld [vmem:[%s1 + $0x28] sm:$0xff]
        %v306 = vld [vmem:[%s1 + $0x30] sm:$0xff]
        %v307 = vld [vmem:[%s1 + $0x38] sm:$0xff]
        %v308 = vld [vmem:[%s1 + $0x40] sm:$0xff]
        %v309 = vld [vmem:[%s1 + $0x48] sm:$0xff]
        %v310 = vld [vmem:[%s1 + $0x50] sm:$0xff]
        %v311 = vld [vmem:[%s1 + $0x58] sm:$0xff]
        %v312 = vld [vmem:[%s1 + $0x60] sm:$0xff]
        %v313 = vld [vmem:[%s1 + $0x68] sm:$0xff]
        %v314 = vld [vmem:[%s1 + $0x70] sm:$0xff]
        %v315 = vld [vmem:[%s1 + $0x78] sm:$0xff]
        %v316 = vld [vmem:[%s259] sm:$0xff]
        %v317 = vld [vmem:[%s259 + $0x8] sm:$0xff]
        %319 = vset.pattern.permute.xlu0 0
        %320 = vperm.xlu0 %319, %v300
        %v321 = vpop.permute.xlu0 %320
        %324 = vset.pattern.permute.xlu0 0
        %325 = vperm.xlu0 %324, %v301
        %v326 = vpop.permute.xlu0 %325
        %329 = vset.pattern.permute.xlu0 0
        %330 = vperm.xlu0 %329, %v302
        %v331 = vpop.permute.xlu0 %330
        %334 = vset.pattern.permute.xlu0 0
        %335 = vperm.xlu0 %334, %v303
        %v336 = vpop.permute.xlu0 %335
        %339 = vset.pattern.permute.xlu0 0
        %340 = vperm.xlu0 %339, %v304
        %v341 = vpop.permute.xlu0 %340
        %344 = vset.pattern.permute.xlu0 0
        %345 = vperm.xlu0 %344, %v305
        %v346 = vpop.permute.xlu0 %345
        %349 = vset.pattern.permute.xlu0 0
        %350 = vperm.xlu0 %349, %v306
        %v351 = vpop.permute.xlu0 %350
        %354 = vset.pattern.permute.xlu0 0
        %355 = vperm.xlu0 %354, %v307
        %v356 = vpop.permute.xlu0 %355
        %359 = vset.pattern.permute.xlu0 0
        %360 = vperm.xlu0 %359, %v308
        %v361 = vpop.permute.xlu0 %360
        %364 = vset.pattern.permute.xlu0 0
        %365 = vperm.xlu0 %364, %v309
        %v366 = vpop.permute.xlu0 %365
        %369 = vset.pattern.permute.xlu0 0
        %370 = vperm.xlu0 %369, %v310
        %v371 = vpop.permute.xlu0 %370
        %374 = vset.pattern.permute.xlu0 0
        %375 = vperm.xlu0 %374, %v311
        %v376 = vpop.permute.xlu0 %375
        %379 = vset.pattern.permute.xlu0 0
        %380 = vperm.xlu0 %379, %v312
        %v381 = vpop.permute.xlu0 %380
        %384 = vset.pattern.permute.xlu0 0
        %385 = vperm.xlu0 %384, %v313
        %v386 = vpop.permute.xlu0 %385
        %389 = vset.pattern.permute.xlu0 0
        %390 = vperm.xlu0 %389, %v314
        %v391 = vpop.permute.xlu0 %390
        %394 = vset.pattern.permute.xlu0 0
        %395 = vperm.xlu0 %394, %v315
        %v396 = vpop.permute.xlu0 %395
        %v400 = vlaneseq
        %v401 = vshrl.u32 %v400, 7
        %v402 = vsub.s32 0, %v401
        %v403 = vrot.slane %v316, %v402
        %v404 = vlaneseq
        %v405 = vshrl.u32 %v404, 7
        %v406 = vsub.s32 4, %v405
        %v407 = vrot.slane %v316, %v406
        %v408 = vlaneseq
        %v409 = vshrl.u32 %v408, 7
        %v410 = vsub.s32 0, %v409
        %v411 = vrot.slane %v317, %v410
        %v412 = vlaneseq
        %v413 = vshrl.u32 %v412, 7
        %v414 = vsub.s32 4, %v413
        %v415 = vrot.slane %v317, %v414
        %v420 = vlaneseq
        %v421 = vshrl.u32 %v420, 7
        %v422 = vsub.s32 0, %v421
        %v423 = vrot.slane %v403, %v422
        %v424 = vlaneseq
        %v425 = vshrl.u32 %v424, 7
        %v426 = vsub.s32 0, %v425
        %v427 = vrot.slane %v407, %v426
        %v428 = vlaneseq
        %v429 = vshrl.u32 %v428, 7
        %v430 = vsub.s32 0, %v429
        %v431 = vrot.slane %v411, %v430
        %v432 = vlaneseq
        %v433 = vshrl.u32 %v432, 7
        %v434 = vsub.s32 0, %v433
        %v435 = vrot.slane %v415, %v434
        %v436 = vmul.f32 %v321, %v423
        %v437 = vmul.f32 %v321, %v427
        %v438 = vmul.f32 %v321, %v431
        %v439 = vmul.f32 %v321, %v435
        %v440 = vmul.f32 %v326, %v423
        %v441 = vmul.f32 %v326, %v427
        %v442 = vmul.f32 %v326, %v431
        %v443 = vmul.f32 %v326, %v435
        %v444 = vmul.f32 %v331, %v423
        %v445 = vmul.f32 %v331, %v427
        %v446 = vmul.f32 %v331, %v431
        %v447 = vmul.f32 %v331, %v435
        %v448 = vmul.f32 %v336, %v423
        %v449 = vmul.f32 %v336, %v427
        %v450 = vmul.f32 %v336, %v431
        %v451 = vmul.f32 %v336, %v435
        %v452 = vmul.f32 %v341, %v423
        %v453 = vmul.f32 %v341, %v427
        %v454 = vmul.f32 %v341, %v431
        %v455 = vmul.f32 %v341, %v435
        %v456 = vmul.f32 %v346, %v423
        %v457 = vmul.f32 %v346, %v427
        %v458 = vmul.f32 %v346, %v431
        %v459 = vmul.f32 %v346, %v435
        %v460 = vmul.f32 %v351, %v423
        %v461 = vmul.f32 %v351, %v427
        %v462 = vmul.f32 %v351, %v431
        %v463 = vmul.f32 %v351, %v435
        %v464 = vmul.f32 %v356, %v423
        %v465 = vmul.f32 %v356, %v427
        %v466 = vmul.f32 %v356, %v431
        %v467 = vmul.f32 %v356, %v435
        %v468 = vmul.f32 %v361, %v423
        %v469 = vmul.f32 %v361, %v427
        %v470 = vmul.f32 %v361, %v431
        %v471 = vmul.f32 %v361, %v435
        %v472 = vmul.f32 %v366, %v423
        %v473 = vmul.f32 %v366, %v427
        %v474 = vmul.f32 %v366, %v431
        %v475 = vmul.f32 %v366, %v435
        %v476 = vmul.f32 %v371, %v423
        %v477 = vmul.f32 %v371, %v427
        %v478 = vmul.f32 %v371, %v431
        %v479 = vmul.f32 %v371, %v435
        %v480 = vmul.f32 %v376, %v423
        %v481 = vmul.f32 %v376, %v427
        %v482 = vmul.f32 %v376, %v431
        %v483 = vmul.f32 %v376, %v435
        %v484 = vmul.f32 %v381, %v423
        %v485 = vmul.f32 %v381, %v427
        %v486 = vmul.f32 %v381, %v431
        %v487 = vmul.f32 %v381, %v435
        %v488 = vmul.f32 %v386, %v423
        %v489 = vmul.f32 %v386, %v427
        %v490 = vmul.f32 %v386, %v431
        %v491 = vmul.f32 %v386, %v435
        %v492 = vmul.f32 %v391, %v423
        %v493 = vmul.f32 %v391, %v427
        %v494 = vmul.f32 %v391, %v431
        %v495 = vmul.f32 %v391, %v435
        %v496 = vmul.f32 %v396, %v423
        %v497 = vmul.f32 %v396, %v427
        %v498 = vmul.f32 %v396, %v431
        %v499 = vmul.f32 %v396, %v435
        %501 = vset.pattern.permute.xlu0 0
        %502 = vperm.xlu0 %501, %v284
        %v503 = vpop.permute.xlu0 %502
        %506 = vset.pattern.permute.xlu0 0
        %507 = vperm.xlu0 %506, %v285
        %v508 = vpop.permute.xlu0 %507
        %511 = vset.pattern.permute.xlu0 0
        %512 = vperm.xlu0 %511, %v286
        %v513 = vpop.permute.xlu0 %512
        %516 = vset.pattern.permute.xlu0 0
        %517 = vperm.xlu0 %516, %v287
        %v518 = vpop.permute.xlu0 %517
        %521 = vset.pattern.permute.xlu0 0
        %522 = vperm.xlu0 %521, %v288
        %v523 = vpop.permute.xlu0 %522
        %526 = vset.pattern.permute.xlu0 0
        %527 = vperm.xlu0 %526, %v289
        %v528 = vpop.permute.xlu0 %527
        %531 = vset.pattern.permute.xlu0 0
        %532 = vperm.xlu0 %531, %v290
        %v533 = vpop.permute.xlu0 %532
        %536 = vset.pattern.permute.xlu0 0
        %537 = vperm.xlu0 %536, %v291
        %v538 = vpop.permute.xlu0 %537
        %541 = vset.pattern.permute.xlu0 0
        %542 = vperm.xlu0 %541, %v292
        %v543 = vpop.permute.xlu0 %542
        %546 = vset.pattern.permute.xlu0 0
        %547 = vperm.xlu0 %546, %v293
        %v548 = vpop.permute.xlu0 %547
        %551 = vset.pattern.permute.xlu0 0
        %552 = vperm.xlu0 %551, %v294
        %v553 = vpop.permute.xlu0 %552
        %556 = vset.pattern.permute.xlu0 0
        %557 = vperm.xlu0 %556, %v295
        %v558 = vpop.permute.xlu0 %557
        %561 = vset.pattern.permute.xlu0 0
        %562 = vperm.xlu0 %561, %v296
        %v563 = vpop.permute.xlu0 %562
        %566 = vset.pattern.permute.xlu0 0
        %567 = vperm.xlu0 %566, %v297
        %v568 = vpop.permute.xlu0 %567
        %571 = vset.pattern.permute.xlu0 0
        %572 = vperm.xlu0 %571, %v298
        %v573 = vpop.permute.xlu0 %572
        %576 = vset.pattern.permute.xlu0 0
        %577 = vperm.xlu0 %576, %v299
        %v578 = vpop.permute.xlu0 %577
        %v580 = vadd.f32 %v503, %v436
        %v581 = vadd.f32 %v503, %v437
        %v582 = vadd.f32 %v503, %v438
        %v583 = vadd.f32 %v503, %v439
        %v584 = vadd.f32 %v508, %v440
        %v585 = vadd.f32 %v508, %v441
        %v586 = vadd.f32 %v508, %v442
        %v587 = vadd.f32 %v508, %v443
        %v588 = vadd.f32 %v513, %v444
        %v589 = vadd.f32 %v513, %v445
        %v590 = vadd.f32 %v513, %v446
        %v591 = vadd.f32 %v513, %v447
        %v592 = vadd.f32 %v518, %v448
        %v593 = vadd.f32 %v518, %v449
        %v594 = vadd.f32 %v518, %v450
        %v595 = vadd.f32 %v518, %v451
        %v596 = vadd.f32 %v523, %v452
        %v597 = vadd.f32 %v523, %v453
        %v598 = vadd.f32 %v523, %v454
        %v599 = vadd.f32 %v523, %v455
        %v600 = vadd.f32 %v528, %v456
        %v601 = vadd.f32 %v528, %v457
        %v602 = vadd.f32 %v528, %v458
        %v603 = vadd.f32 %v528, %v459
        %v604 = vadd.f32 %v533, %v460
        %v605 = vadd.f32 %v533, %v461
        %v606 = vadd.f32 %v533, %v462
        %v607 = vadd.f32 %v533, %v463
        %v608 = vadd.f32 %v538, %v464
        %v609 = vadd.f32 %v538, %v465
        %v610 = vadd.f32 %v538, %v466
        %v611 = vadd.f32 %v538, %v467
        %v612 = vadd.f32 %v543, %v468
        %v613 = vadd.f32 %v543, %v469
        %v614 = vadd.f32 %v543, %v470
        %v615 = vadd.f32 %v543, %v471
        %v616 = vadd.f32 %v548, %v472
        %v617 = vadd.f32 %v548, %v473
        %v618 = vadd.f32 %v548, %v474
        %v619 = vadd.f32 %v548, %v475
        %v620 = vadd.f32 %v553, %v476
        %v621 = vadd.f32 %v553, %v477
        %v622 = vadd.f32 %v553, %v478
        %v623 = vadd.f32 %v553, %v479
        %v624 = vadd.f32 %v558, %v480
        %v625 = vadd.f32 %v558, %v481
        %v626 = vadd.f32 %v558, %v482
        %v627 = vadd.f32 %v558, %v483
        %v628 = vadd.f32 %v563, %v484
        %v629 = vadd.f32 %v563, %v485
        %v630 = vadd.f32 %v563, %v486
        %v631 = vadd.f32 %v563, %v487
        %v632 = vadd.f32 %v568, %v488
        %v633 = vadd.f32 %v568, %v489
        %v634 = vadd.f32 %v568, %v490
        %v635 = vadd.f32 %v568, %v491
        %v636 = vadd.f32 %v573, %v492
        %v637 = vadd.f32 %v573, %v493
        %v638 = vadd.f32 %v573, %v494
        %v639 = vadd.f32 %v573, %v495
        %v640 = vadd.f32 %v578, %v496
        %v641 = vadd.f32 %v578, %v497
        %v642 = vadd.f32 %v578, %v498
        %v643 = vadd.f32 %v578, %v499
        %644 = vset.pattern.permute.xlu0 1
        %645 = vperm.xlu0 %644, %v300
        %v646 = vpop.permute.xlu0 %645
        %648 = vset.pattern.permute.xlu0 1
        %649 = vperm.xlu0 %648, %v301
        %v650 = vpop.permute.xlu0 %649
        %652 = vset.pattern.permute.xlu0 1
        %653 = vperm.xlu0 %652, %v302
        %v654 = vpop.permute.xlu0 %653
        %656 = vset.pattern.permute.xlu0 1
        %657 = vperm.xlu0 %656, %v303
        %v658 = vpop.permute.xlu0 %657
        %660 = vset.pattern.permute.xlu0 1
        %661 = vperm.xlu0 %660, %v304
        %v662 = vpop.permute.xlu0 %661
        %664 = vset.pattern.permute.xlu0 1
        %665 = vperm.xlu0 %664, %v305
        %v666 = vpop.permute.xlu0 %665
        %668 = vset.pattern.permute.xlu0 1
        %669 = vperm.xlu0 %668, %v306
        %v670 = vpop.permute.xlu0 %669
        %672 = vset.pattern.permute.xlu0 1
        %673 = vperm.xlu0 %672, %v307
        %v674 = vpop.permute.xlu0 %673
        %676 = vset.pattern.permute.xlu0 1
        %677 = vperm.xlu0 %676, %v308
        %v678 = vpop.permute.xlu0 %677
        %680 = vset.pattern.permute.xlu0 1
        %681 = vperm.xlu0 %680, %v309
        %v682 = vpop.permute.xlu0 %681
        %684 = vset.pattern.permute.xlu0 1
        %685 = vperm.xlu0 %684, %v310
        %v686 = vpop.permute.xlu0 %685
        %688 = vset.pattern.permute.xlu0 1
        %689 = vperm.xlu0 %688, %v311
        %v690 = vpop.permute.xlu0 %689
        %692 = vset.pattern.permute.xlu0 1
        %693 = vperm.xlu0 %692, %v312
        %v694 = vpop.permute.xlu0 %693
        %696 = vset.pattern.permute.xlu0 1
        %697 = vperm.xlu0 %696, %v313
        %v698 = vpop.permute.xlu0 %697
        %700 = vset.pattern.permute.xlu0 1
        %701 = vperm.xlu0 %700, %v314
        %v702 = vpop.permute.xlu0 %701
        %704 = vset.pattern.permute.xlu0 1
        %705 = vperm.xlu0 %704, %v315
        %v706 = vpop.permute.xlu0 %705
        %v708 = vlaneseq
        %v709 = vshrl.u32 %v708, 7
        %v710 = vsub.s32 1, %v709
        %v711 = vrot.slane %v316, %v710
        %v712 = vlaneseq
        %v713 = vshrl.u32 %v712, 7
        %v714 = vsub.s32 5, %v713
        %v715 = vrot.slane %v316, %v714
        %v716 = vlaneseq
        %v717 = vshrl.u32 %v716, 7
        %v718 = vsub.s32 1, %v717
        %v719 = vrot.slane %v317, %v718
        %v720 = vlaneseq
        %v721 = vshrl.u32 %v720, 7
        %v722 = vsub.s32 5, %v721
        %v723 = vrot.slane %v317, %v722
        %v728 = vlaneseq
        %v729 = vshrl.u32 %v728, 7
        %v730 = vsub.s32 1, %v729
        %v731 = vrot.slane %v711, %v730
        %v732 = vlaneseq
        %v733 = vshrl.u32 %v732, 7
        %v734 = vsub.s32 1, %v733
        %v735 = vrot.slane %v715, %v734
        %v736 = vlaneseq
        %v737 = vshrl.u32 %v736, 7
        %v738 = vsub.s32 1, %v737
        %v739 = vrot.slane %v719, %v738
        %v740 = vlaneseq
        %v741 = vshrl.u32 %v740, 7
        %v742 = vsub.s32 1, %v741
        %v743 = vrot.slane %v723, %v742
        %v744 = vmul.f32 %v646, %v731
        %v745 = vmul.f32 %v646, %v735
        %v746 = vmul.f32 %v646, %v739
        %v747 = vmul.f32 %v646, %v743
        %v748 = vmul.f32 %v650, %v731
        %v749 = vmul.f32 %v650, %v735
        %v750 = vmul.f32 %v650, %v739
        %v751 = vmul.f32 %v650, %v743
        %v752 = vmul.f32 %v654, %v731
        %v753 = vmul.f32 %v654, %v735
        %v754 = vmul.f32 %v654, %v739
        %v755 = vmul.f32 %v654, %v743
        %v756 = vmul.f32 %v658, %v731
        %v757 = vmul.f32 %v658, %v735
        %v758 = vmul.f32 %v658, %v739
        %v759 = vmul.f32 %v658, %v743
        %v760 = vmul.f32 %v662, %v731
        %v761 = vmul.f32 %v662, %v735
        %v762 = vmul.f32 %v662, %v739
        %v763 = vmul.f32 %v662, %v743
        %v764 = vmul.f32 %v666, %v731
        %v765 = vmul.f32 %v666, %v735
        %v766 = vmul.f32 %v666, %v739
        %v767 = vmul.f32 %v666, %v743
        %v768 = vmul.f32 %v670, %v731
        %v769 = vmul.f32 %v670, %v735
        %v770 = vmul.f32 %v670, %v739
        %v771 = vmul.f32 %v670, %v743
        %v772 = vmul.f32 %v674, %v731
        %v773 = vmul.f32 %v674, %v735
        %v774 = vmul.f32 %v674, %v739
        %v775 = vmul.f32 %v674, %v743
        %v776 = vmul.f32 %v678, %v731
        %v777 = vmul.f32 %v678, %v735
        %v778 = vmul.f32 %v678, %v739
        %v779 = vmul.f32 %v678, %v743
        %v780 = vmul.f32 %v682, %v731
        %v781 = vmul.f32 %v682, %v735
        %v782 = vmul.f32 %v682, %v739
        %v783 = vmul.f32 %v682, %v743
        %v784 = vmul.f32 %v686, %v731
        %v785 = vmul.f32 %v686, %v735
        %v786 = vmul.f32 %v686, %v739
        %v787 = vmul.f32 %v686, %v743
        %v788 = vmul.f32 %v690, %v731
        %v789 = vmul.f32 %v690, %v735
        %v790 = vmul.f32 %v690, %v739
        %v791 = vmul.f32 %v690, %v743
        %v792 = vmul.f32 %v694, %v731
        %v793 = vmul.f32 %v694, %v735
        %v794 = vmul.f32 %v694, %v739
        %v795 = vmul.f32 %v694, %v743
        %v796 = vmul.f32 %v698, %v731
        %v797 = vmul.f32 %v698, %v735
        %v798 = vmul.f32 %v698, %v739
        %v799 = vmul.f32 %v698, %v743
        %v800 = vmul.f32 %v702, %v731
        %v801 = vmul.f32 %v702, %v735
        %v802 = vmul.f32 %v702, %v739
        %v803 = vmul.f32 %v702, %v743
        %v804 = vmul.f32 %v706, %v731
        %v805 = vmul.f32 %v706, %v735
        %v806 = vmul.f32 %v706, %v739
        %v807 = vmul.f32 %v706, %v743
        %v808 = vadd.f32 %v580, %v744
        %v809 = vadd.f32 %v581, %v745
        %v810 = vadd.f32 %v582, %v746
        %v811 = vadd.f32 %v583, %v747
        %v812 = vadd.f32 %v584, %v748
        %v813 = vadd.f32 %v585, %v749
        %v814 = vadd.f32 %v586, %v750
        %v815 = vadd.f32 %v587, %v751
        %v816 = vadd.f32 %v588, %v752
        %v817 = vadd.f32 %v589, %v753
        %v818 = vadd.f32 %v590, %v754
        %v819 = vadd.f32 %v591, %v755
        %v820 = vadd.f32 %v592, %v756
        %v821 = vadd.f32 %v593, %v757
        %v822 = vadd.f32 %v594, %v758
        %v823 = vadd.f32 %v595, %v759
        %v824 = vadd.f32 %v596, %v760
        %v825 = vadd.f32 %v597, %v761
        %v826 = vadd.f32 %v598, %v762
        %v827 = vadd.f32 %v599, %v763
        %v828 = vadd.f32 %v600, %v764
        %v829 = vadd.f32 %v601, %v765
        %v830 = vadd.f32 %v602, %v766
        %v831 = vadd.f32 %v603, %v767
        %v832 = vadd.f32 %v604, %v768
        %v833 = vadd.f32 %v605, %v769
        %v834 = vadd.f32 %v606, %v770
        %v835 = vadd.f32 %v607, %v771
        %v836 = vadd.f32 %v608, %v772
        %v837 = vadd.f32 %v609, %v773
        %v838 = vadd.f32 %v610, %v774
        %v839 = vadd.f32 %v611, %v775
        %v840 = vadd.f32 %v612, %v776
        %v841 = vadd.f32 %v613, %v777
        %v842 = vadd.f32 %v614, %v778
        %v843 = vadd.f32 %v615, %v779
        %v844 = vadd.f32 %v616, %v780
        %v845 = vadd.f32 %v617, %v781
        %v846 = vadd.f32 %v618, %v782
        %v847 = vadd.f32 %v619, %v783
        %v848 = vadd.f32 %v620, %v784
        %v849 = vadd.f32 %v621, %v785
        %v850 = vadd.f32 %v622, %v786
        %v851 = vadd.f32 %v623, %v787
        %v852 = vadd.f32 %v624, %v788
        %v853 = vadd.f32 %v625, %v789
        %v854 = vadd.f32 %v626, %v790
        %v855 = vadd.f32 %v627, %v791
        %v856 = vadd.f32 %v628, %v792
        %v857 = vadd.f32 %v629, %v793
        %v858 = vadd.f32 %v630, %v794
        %v859 = vadd.f32 %v631, %v795
        %v860 = vadd.f32 %v632, %v796
        %v861 = vadd.f32 %v633, %v797
        %v862 = vadd.f32 %v634, %v798
        %v863 = vadd.f32 %v635, %v799
        %v864 = vadd.f32 %v636, %v800
        %v865 = vadd.f32 %v637, %v801
        %v866 = vadd.f32 %v638, %v802
        %v867 = vadd.f32 %v639, %v803
        %v868 = vadd.f32 %v640, %v804
        %v869 = vadd.f32 %v641, %v805
        %v870 = vadd.f32 %v642, %v806
        %v871 = vadd.f32 %v643, %v807
        %872 = vset.pattern.permute.xlu0 2
        %873 = vperm.xlu0 %872, %v300
        %v874 = vpop.permute.xlu0 %873
        %876 = vset.pattern.permute.xlu0 2
        %877 = vperm.xlu0 %876, %v301
        %v878 = vpop.permute.xlu0 %877
        %880 = vset.pattern.permute.xlu0 2
        %881 = vperm.xlu0 %880, %v302
        %v882 = vpop.permute.xlu0 %881
        %884 = vset.pattern.permute.xlu0 2
        %885 = vperm.xlu0 %884, %v303
        %v886 = vpop.permute.xlu0 %885
        %888 = vset.pattern.permute.xlu0 2
        %889 = vperm.xlu0 %888, %v304
        %v890 = vpop.permute.xlu0 %889
        %892 = vset.pattern.permute.xlu0 2
        %893 = vperm.xlu0 %892, %v305
        %v894 = vpop.permute.xlu0 %893
        %896 = vset.pattern.permute.xlu0 2
        %897 = vperm.xlu0 %896, %v306
        %v898 = vpop.permute.xlu0 %897
        %900 = vset.pattern.permute.xlu0 2
        %901 = vperm.xlu0 %900, %v307
        %v902 = vpop.permute.xlu0 %901
        %904 = vset.pattern.permute.xlu0 2
        %905 = vperm.xlu0 %904, %v308
        %v906 = vpop.permute.xlu0 %905
        %908 = vset.pattern.permute.xlu0 2
        %909 = vperm.xlu0 %908, %v309
        %v910 = vpop.permute.xlu0 %909
        %912 = vset.pattern.permute.xlu0 2
        %913 = vperm.xlu0 %912, %v310
        %v914 = vpop.permute.xlu0 %913
        %916 = vset.pattern.permute.xlu0 2
        %917 = vperm.xlu0 %916, %v311
        %v918 = vpop.permute.xlu0 %917
        %920 = vset.pattern.permute.xlu0 2
        %921 = vperm.xlu0 %920, %v312
        %v922 = vpop.permute.xlu0 %921
        %924 = vset.pattern.permute.xlu0 2
        %925 = vperm.xlu0 %924, %v313
        %v926 = vpop.permute.xlu0 %925
        %928 = vset.pattern.permute.xlu0 2
        %929 = vperm.xlu0 %928, %v314
        %v930 = vpop.permute.xlu0 %929
        %932 = vset.pattern.permute.xlu0 2
        %933 = vperm.xlu0 %932, %v315
        %v934 = vpop.permute.xlu0 %933
        %v936 = vlaneseq
        %v937 = vshrl.u32 %v936, 7
        %v938 = vsub.s32 2, %v937
        %v939 = vrot.slane %v316, %v938
        %v940 = vlaneseq
        %v941 = vshrl.u32 %v940, 7
        %v942 = vsub.s32 6, %v941
        %v943 = vrot.slane %v316, %v942
        %v944 = vlaneseq
        %v945 = vshrl.u32 %v944, 7
        %v946 = vsub.s32 2, %v945
        %v947 = vrot.slane %v317, %v946
        %v948 = vlaneseq
        %v949 = vshrl.u32 %v948, 7
        %v950 = vsub.s32 6, %v949
        %v951 = vrot.slane %v317, %v950
        %v956 = vlaneseq
        %v957 = vshrl.u32 %v956, 7
        %v958 = vsub.s32 2, %v957
        %v959 = vrot.slane %v939, %v958
        %v960 = vlaneseq
        %v961 = vshrl.u32 %v960, 7
        %v962 = vsub.s32 2, %v961
        %v963 = vrot.slane %v943, %v962
        %v964 = vlaneseq
        %v965 = vshrl.u32 %v964, 7
        %v966 = vsub.s32 2, %v965
        %v967 = vrot.slane %v947, %v966
        %v968 = vlaneseq
        %v969 = vshrl.u32 %v968, 7
        %v970 = vsub.s32 2, %v969
        %v971 = vrot.slane %v951, %v970
        %v972 = vmul.f32 %v874, %v959
        %v973 = vmul.f32 %v874, %v963
        %v974 = vmul.f32 %v874, %v967
        %v975 = vmul.f32 %v874, %v971
        %v976 = vmul.f32 %v878, %v959
        %v977 = vmul.f32 %v878, %v963
        %v978 = vmul.f32 %v878, %v967
        %v979 = vmul.f32 %v878, %v971
        %v980 = vmul.f32 %v882, %v959
        %v981 = vmul.f32 %v882, %v963
        %v982 = vmul.f32 %v882, %v967
        %v983 = vmul.f32 %v882, %v971
        %v984 = vmul.f32 %v886, %v959
        %v985 = vmul.f32 %v886, %v963
        %v986 = vmul.f32 %v886, %v967
        %v987 = vmul.f32 %v886, %v971
        %v988 = vmul.f32 %v890, %v959
        %v989 = vmul.f32 %v890, %v963
        %v990 = vmul.f32 %v890, %v967
        %v991 = vmul.f32 %v890, %v971
        %v992 = vmul.f32 %v894, %v959
        %v993 = vmul.f32 %v894, %v963
        %v994 = vmul.f32 %v894, %v967
        %v995 = vmul.f32 %v894, %v971
        %v996 = vmul.f32 %v898, %v959
        %v997 = vmul.f32 %v898, %v963
        %v998 = vmul.f32 %v898, %v967
        %v999 = vmul.f32 %v898, %v971
        %v1000 = vmul.f32 %v902, %v959
        %v1001 = vmul.f32 %v902, %v963
        %v1002 = vmul.f32 %v902, %v967
        %v1003 = vmul.f32 %v902, %v971
        %v1004 = vmul.f32 %v906, %v959
        %v1005 = vmul.f32 %v906, %v963
        %v1006 = vmul.f32 %v906, %v967
        %v1007 = vmul.f32 %v906, %v971
        %v1008 = vmul.f32 %v910, %v959
        %v1009 = vmul.f32 %v910, %v963
        %v1010 = vmul.f32 %v910, %v967
        %v1011 = vmul.f32 %v910, %v971
        %v1012 = vmul.f32 %v914, %v959
        %v1013 = vmul.f32 %v914, %v963
        %v1014 = vmul.f32 %v914, %v967
        %v1015 = vmul.f32 %v914, %v971
        %v1016 = vmul.f32 %v918, %v959
        %v1017 = vmul.f32 %v918, %v963
        %v1018 = vmul.f32 %v918, %v967
        %v1019 = vmul.f32 %v918, %v971
        %v1020 = vmul.f32 %v922, %v959
        %v1021 = vmul.f32 %v922, %v963
        %v1022 = vmul.f32 %v922, %v967
        %v1023 = vmul.f32 %v922, %v971
        %v1024 = vmul.f32 %v926, %v959
        %v1025 = vmul.f32 %v926, %v963
        %v1026 = vmul.f32 %v926, %v967
        %v1027 = vmul.f32 %v926, %v971
        %v1028 = vmul.f32 %v930, %v959
        %v1029 = vmul.f32 %v930, %v963
        %v1030 = vmul.f32 %v930, %v967
        %v1031 = vmul.f32 %v930, %v971
        %v1032 = vmul.f32 %v934, %v959
        %v1033 = vmul.f32 %v934, %v963
        %v1034 = vmul.f32 %v934, %v967
        %v1035 = vmul.f32 %v934, %v971
        %v1036 = vadd.f32 %v808, %v972
        %v1037 = vadd.f32 %v809, %v973
        %v1038 = vadd.f32 %v810, %v974
        %v1039 = vadd.f32 %v811, %v975
        %v1040 = vadd.f32 %v812, %v976
        %v1041 = vadd.f32 %v813, %v977
        %v1042 = vadd.f32 %v814, %v978
        %v1043 = vadd.f32 %v815, %v979
        %v1044 = vadd.f32 %v816, %v980
        %v1045 = vadd.f32 %v817, %v981
        %v1046 = vadd.f32 %v818, %v982
        %v1047 = vadd.f32 %v819, %v983
        %v1048 = vadd.f32 %v820, %v984
        %v1049 = vadd.f32 %v821, %v985
        %v1050 = vadd.f32 %v822, %v986
        %v1051 = vadd.f32 %v823, %v987
        %v1052 = vadd.f32 %v824, %v988
        %v1053 = vadd.f32 %v825, %v989
        %v1054 = vadd.f32 %v826, %v990
        %v1055 = vadd.f32 %v827, %v991
        %v1056 = vadd.f32 %v828, %v992
        %v1057 = vadd.f32 %v829, %v993
        %v1058 = vadd.f32 %v830, %v994
        %v1059 = vadd.f32 %v831, %v995
        %v1060 = vadd.f32 %v832, %v996
        %v1061 = vadd.f32 %v833, %v997
        %v1062 = vadd.f32 %v834, %v998
        %v1063 = vadd.f32 %v835, %v999
        %v1064 = vadd.f32 %v836, %v1000
        %v1065 = vadd.f32 %v837, %v1001
        %v1066 = vadd.f32 %v838, %v1002
        %v1067 = vadd.f32 %v839, %v1003
        %v1068 = vadd.f32 %v840, %v1004
        %v1069 = vadd.f32 %v841, %v1005
        %v1070 = vadd.f32 %v842, %v1006
        %v1071 = vadd.f32 %v843, %v1007
        %v1072 = vadd.f32 %v844, %v1008
        %v1073 = vadd.f32 %v845, %v1009
        %v1074 = vadd.f32 %v846, %v1010
        %v1075 = vadd.f32 %v847, %v1011
        %v1076 = vadd.f32 %v848, %v1012
        %v1077 = vadd.f32 %v849, %v1013
        %v1078 = vadd.f32 %v850, %v1014
        %v1079 = vadd.f32 %v851, %v1015
        %v1080 = vadd.f32 %v852, %v1016
        %v1081 = vadd.f32 %v853, %v1017
        %v1082 = vadd.f32 %v854, %v1018
        %v1083 = vadd.f32 %v855, %v1019
        %v1084 = vadd.f32 %v856, %v1020
        %v1085 = vadd.f32 %v857, %v1021
        %v1086 = vadd.f32 %v858, %v1022
        %v1087 = vadd.f32 %v859, %v1023
        %v1088 = vadd.f32 %v860, %v1024
        %v1089 = vadd.f32 %v861, %v1025
        %v1090 = vadd.f32 %v862, %v1026
        %v1091 = vadd.f32 %v863, %v1027
        %v1092 = vadd.f32 %v864, %v1028
        %v1093 = vadd.f32 %v865, %v1029
        %v1094 = vadd.f32 %v866, %v1030
        %v1095 = vadd.f32 %v867, %v1031
        %v1096 = vadd.f32 %v868, %v1032
        %v1097 = vadd.f32 %v869, %v1033
        %v1098 = vadd.f32 %v870, %v1034
        %v1099 = vadd.f32 %v871, %v1035
        %1100 = vset.pattern.permute.xlu0 3
        %1101 = vperm.xlu0 %1100, %v300
        %v1102 = vpop.permute.xlu0 %1101
        %1104 = vset.pattern.permute.xlu0 3
        %1105 = vperm.xlu0 %1104, %v301
        %v1106 = vpop.permute.xlu0 %1105
        %1108 = vset.pattern.permute.xlu0 3
        %1109 = vperm.xlu0 %1108, %v302
        %v1110 = vpop.permute.xlu0 %1109
        %1112 = vset.pattern.permute.xlu0 3
        %1113 = vperm.xlu0 %1112, %v303
        %v1114 = vpop.permute.xlu0 %1113
        %1116 = vset.pattern.permute.xlu0 3
        %1117 = vperm.xlu0 %1116, %v304
        %v1118 = vpop.permute.xlu0 %1117
        %1120 = vset.pattern.permute.xlu0 3
        %1121 = vperm.xlu0 %1120, %v305
        %v1122 = vpop.permute.xlu0 %1121
        %1124 = vset.pattern.permute.xlu0 3
        %1125 = vperm.xlu0 %1124, %v306
        %v1126 = vpop.permute.xlu0 %1125
        %1128 = vset.pattern.permute.xlu0 3
        %1129 = vperm.xlu0 %1128, %v307
        %v1130 = vpop.permute.xlu0 %1129
        %1132 = vset.pattern.permute.xlu0 3
        %1133 = vperm.xlu0 %1132, %v308
        %v1134 = vpop.permute.xlu0 %1133
        %1136 = vset.pattern.permute.xlu0 3
        %1137 = vperm.xlu0 %1136, %v309
        %v1138 = vpop.permute.xlu0 %1137
        %1140 = vset.pattern.permute.xlu0 3
        %1141 = vperm.xlu0 %1140, %v310
        %v1142 = vpop.permute.xlu0 %1141
        %1144 = vset.pattern.permute.xlu0 3
        %1145 = vperm.xlu0 %1144, %v311
        %v1146 = vpop.permute.xlu0 %1145
        %1148 = vset.pattern.permute.xlu0 3
        %1149 = vperm.xlu0 %1148, %v312
        %v1150 = vpop.permute.xlu0 %1149
        %1152 = vset.pattern.permute.xlu0 3
        %1153 = vperm.xlu0 %1152, %v313
        %v1154 = vpop.permute.xlu0 %1153
        %1156 = vset.pattern.permute.xlu0 3
        %1157 = vperm.xlu0 %1156, %v314
        %v1158 = vpop.permute.xlu0 %1157
        %1160 = vset.pattern.permute.xlu0 3
        %1161 = vperm.xlu0 %1160, %v315
        %v1162 = vpop.permute.xlu0 %1161
        %v1164 = vlaneseq
        %v1165 = vshrl.u32 %v1164, 7
        %v1166 = vsub.s32 3, %v1165
        %v1167 = vrot.slane %v316, %v1166
        %v1168 = vlaneseq
        %v1169 = vshrl.u32 %v1168, 7
        %v1170 = vsub.s32 7, %v1169
        %v1171 = vrot.slane %v316, %v1170
        %v1172 = vlaneseq
        %v1173 = vshrl.u32 %v1172, 7
        %v1174 = vsub.s32 3, %v1173
        %v1175 = vrot.slane %v317, %v1174
        %v1176 = vlaneseq
        %v1177 = vshrl.u32 %v1176, 7
        %v1178 = vsub.s32 7, %v1177
        %v1179 = vrot.slane %v317, %v1178
        %v1184 = vlaneseq
        %v1185 = vshrl.u32 %v1184, 7
        %v1186 = vsub.s32 3, %v1185
        %v1187 = vrot.slane %v1167, %v1186
        %v1188 = vlaneseq
        %v1189 = vshrl.u32 %v1188, 7
        %v1190 = vsub.s32 3, %v1189
        %v1191 = vrot.slane %v1171, %v1190
        %v1192 = vlaneseq
        %v1193 = vshrl.u32 %v1192, 7
        %v1194 = vsub.s32 3, %v1193
        %v1195 = vrot.slane %v1175, %v1194
        %v1196 = vlaneseq
        %v1197 = vshrl.u32 %v1196, 7
        %v1198 = vsub.s32 3, %v1197
        %v1199 = vrot.slane %v1179, %v1198
        %v1200 = vmul.f32 %v1102, %v1187
        %v1201 = vmul.f32 %v1102, %v1191
        %v1202 = vmul.f32 %v1102, %v1195
        %v1203 = vmul.f32 %v1102, %v1199
        %v1204 = vmul.f32 %v1106, %v1187
        %v1205 = vmul.f32 %v1106, %v1191
        %v1206 = vmul.f32 %v1106, %v1195
        %v1207 = vmul.f32 %v1106, %v1199
        %v1208 = vmul.f32 %v1110, %v1187
        %v1209 = vmul.f32 %v1110, %v1191
        %v1210 = vmul.f32 %v1110, %v1195
        %v1211 = vmul.f32 %v1110, %v1199
        %v1212 = vmul.f32 %v1114, %v1187
        %v1213 = vmul.f32 %v1114, %v1191
        %v1214 = vmul.f32 %v1114, %v1195
        %v1215 = vmul.f32 %v1114, %v1199
        %v1216 = vmul.f32 %v1118, %v1187
        %v1217 = vmul.f32 %v1118, %v1191
        %v1218 = vmul.f32 %v1118, %v1195
        %v1219 = vmul.f32 %v1118, %v1199
        %v1220 = vmul.f32 %v1122, %v1187
        %v1221 = vmul.f32 %v1122, %v1191
        %v1222 = vmul.f32 %v1122, %v1195
        %v1223 = vmul.f32 %v1122, %v1199
        %v1224 = vmul.f32 %v1126, %v1187
        %v1225 = vmul.f32 %v1126, %v1191
        %v1226 = vmul.f32 %v1126, %v1195
        %v1227 = vmul.f32 %v1126, %v1199
        %v1228 = vmul.f32 %v1130, %v1187
        %v1229 = vmul.f32 %v1130, %v1191
        %v1230 = vmul.f32 %v1130, %v1195
        %v1231 = vmul.f32 %v1130, %v1199
        %v1232 = vmul.f32 %v1134, %v1187
        %v1233 = vmul.f32 %v1134, %v1191
        %v1234 = vmul.f32 %v1134, %v1195
        %v1235 = vmul.f32 %v1134, %v1199
        %v1236 = vmul.f32 %v1138, %v1187
        %v1237 = vmul.f32 %v1138, %v1191
        %v1238 = vmul.f32 %v1138, %v1195
        %v1239 = vmul.f32 %v1138, %v1199
        %v1240 = vmul.f32 %v1142, %v1187
        %v1241 = vmul.f32 %v1142, %v1191
        %v1242 = vmul.f32 %v1142, %v1195
        %v1243 = vmul.f32 %v1142, %v1199
        %v1244 = vmul.f32 %v1146, %v1187
        %v1245 = vmul.f32 %v1146, %v1191
        %v1246 = vmul.f32 %v1146, %v1195
        %v1247 = vmul.f32 %v1146, %v1199
        %v1248 = vmul.f32 %v1150, %v1187
        %v1249 = vmul.f32 %v1150, %v1191
        %v1250 = vmul.f32 %v1150, %v1195
        %v1251 = vmul.f32 %v1150, %v1199
        %v1252 = vmul.f32 %v1154, %v1187
        %v1253 = vmul.f32 %v1154, %v1191
        %v1254 = vmul.f32 %v1154, %v1195
        %v1255 = vmul.f32 %v1154, %v1199
        %v1256 = vmul.f32 %v1158, %v1187
        %v1257 = vmul.f32 %v1158, %v1191
        %v1258 = vmul.f32 %v1158, %v1195
        %v1259 = vmul.f32 %v1158, %v1199
        %v1260 = vmul.f32 %v1162, %v1187
        %v1261 = vmul.f32 %v1162, %v1191
        %v1262 = vmul.f32 %v1162, %v1195
        %v1263 = vmul.f32 %v1162, %v1199
        %v1264 = vadd.f32 %v1036, %v1200
        %v1265 = vadd.f32 %v1037, %v1201
        %v1266 = vadd.f32 %v1038, %v1202
        %v1267 = vadd.f32 %v1039, %v1203
        %v1268 = vadd.f32 %v1040, %v1204
        %v1269 = vadd.f32 %v1041, %v1205
        %v1270 = vadd.f32 %v1042, %v1206
        %v1271 = vadd.f32 %v1043, %v1207
        %v1272 = vadd.f32 %v1044, %v1208
        %v1273 = vadd.f32 %v1045, %v1209
        %v1274 = vadd.f32 %v1046, %v1210
        %v1275 = vadd.f32 %v1047, %v1211
        %v1276 = vadd.f32 %v1048, %v1212
        %v1277 = vadd.f32 %v1049, %v1213
        %v1278 = vadd.f32 %v1050, %v1214
        %v1279 = vadd.f32 %v1051, %v1215
        %v1280 = vadd.f32 %v1052, %v1216
        %v1281 = vadd.f32 %v1053, %v1217
        %v1282 = vadd.f32 %v1054, %v1218
        %v1283 = vadd.f32 %v1055, %v1219
        %v1284 = vadd.f32 %v1056, %v1220
        %v1285 = vadd.f32 %v1057, %v1221
        %v1286 = vadd.f32 %v1058, %v1222
        %v1287 = vadd.f32 %v1059, %v1223
        %v1288 = vadd.f32 %v1060, %v1224
        %v1289 = vadd.f32 %v1061, %v1225
        %v1290 = vadd.f32 %v1062, %v1226
        %v1291 = vadd.f32 %v1063, %v1227
        %v1292 = vadd.f32 %v1064, %v1228
        %v1293 = vadd.f32 %v1065, %v1229
        %v1294 = vadd.f32 %v1066, %v1230
        %v1295 = vadd.f32 %v1067, %v1231
        %v1296 = vadd.f32 %v1068, %v1232
        %v1297 = vadd.f32 %v1069, %v1233
        %v1298 = vadd.f32 %v1070, %v1234
        %v1299 = vadd.f32 %v1071, %v1235
        %v1300 = vadd.f32 %v1072, %v1236
        %v1301 = vadd.f32 %v1073, %v1237
        %v1302 = vadd.f32 %v1074, %v1238
        %v1303 = vadd.f32 %v1075, %v1239
        %v1304 = vadd.f32 %v1076, %v1240
        %v1305 = vadd.f32 %v1077, %v1241
        %v1306 = vadd.f32 %v1078, %v1242
        %v1307 = vadd.f32 %v1079, %v1243
        %v1308 = vadd.f32 %v1080, %v1244
        %v1309 = vadd.f32 %v1081, %v1245
        %v1310 = vadd.f32 %v1082, %v1246
        %v1311 = vadd.f32 %v1083, %v1247
        %v1312 = vadd.f32 %v1084, %v1248
        %v1313 = vadd.f32 %v1085, %v1249
        %v1314 = vadd.f32 %v1086, %v1250
        %v1315 = vadd.f32 %v1087, %v1251
        %v1316 = vadd.f32 %v1088, %v1252
        %v1317 = vadd.f32 %v1089, %v1253
        %v1318 = vadd.f32 %v1090, %v1254
        %v1319 = vadd.f32 %v1091, %v1255
        %v1320 = vadd.f32 %v1092, %v1256
        %v1321 = vadd.f32 %v1093, %v1257
        %v1322 = vadd.f32 %v1094, %v1258
        %v1323 = vadd.f32 %v1095, %v1259
        %v1324 = vadd.f32 %v1096, %v1260
        %v1325 = vadd.f32 %v1097, %v1261
        %v1326 = vadd.f32 %v1098, %v1262
        %v1327 = vadd.f32 %v1099, %v1263
        %v1328 = vmax.f32 %v1264, 1e-06
        %v1329 = vmax.f32 %v1265, 1e-06
        %v1330 = vmax.f32 %v1266, 1e-06
        %v1331 = vmax.f32 %v1267, 1e-06
        %v1332 = vmax.f32 %v1268, 1e-06
        %v1333 = vmax.f32 %v1269, 1e-06
        %v1334 = vmax.f32 %v1270, 1e-06
        %v1335 = vmax.f32 %v1271, 1e-06
        %v1336 = vmax.f32 %v1272, 1e-06
        %v1337 = vmax.f32 %v1273, 1e-06
        %v1338 = vmax.f32 %v1274, 1e-06
        %v1339 = vmax.f32 %v1275, 1e-06
        %v1340 = vmax.f32 %v1276, 1e-06
        %v1341 = vmax.f32 %v1277, 1e-06
        %v1342 = vmax.f32 %v1278, 1e-06
        %v1343 = vmax.f32 %v1279, 1e-06
        %v1344 = vmax.f32 %v1280, 1e-06
        %v1345 = vmax.f32 %v1281, 1e-06
        %v1346 = vmax.f32 %v1282, 1e-06
        %v1347 = vmax.f32 %v1283, 1e-06
        %v1348 = vmax.f32 %v1284, 1e-06
        %v1349 = vmax.f32 %v1285, 1e-06
        %v1350 = vmax.f32 %v1286, 1e-06
        %v1351 = vmax.f32 %v1287, 1e-06
        %v1352 = vmax.f32 %v1288, 1e-06
        %v1353 = vmax.f32 %v1289, 1e-06
        %v1354 = vmax.f32 %v1290, 1e-06
        %v1355 = vmax.f32 %v1291, 1e-06
        %v1356 = vmax.f32 %v1292, 1e-06
        %v1357 = vmax.f32 %v1293, 1e-06
        %v1358 = vmax.f32 %v1294, 1e-06
        %v1359 = vmax.f32 %v1295, 1e-06
        %v1360 = vmax.f32 %v1296, 1e-06
        %v1361 = vmax.f32 %v1297, 1e-06
        %v1362 = vmax.f32 %v1298, 1e-06
        %v1363 = vmax.f32 %v1299, 1e-06
        %v1364 = vmax.f32 %v1300, 1e-06
        %v1365 = vmax.f32 %v1301, 1e-06
        %v1366 = vmax.f32 %v1302, 1e-06
        %v1367 = vmax.f32 %v1303, 1e-06
        %v1368 = vmax.f32 %v1304, 1e-06
        %v1369 = vmax.f32 %v1305, 1e-06
        %v1370 = vmax.f32 %v1306, 1e-06
        %v1371 = vmax.f32 %v1307, 1e-06
        %v1372 = vmax.f32 %v1308, 1e-06
        %v1373 = vmax.f32 %v1309, 1e-06
        %v1374 = vmax.f32 %v1310, 1e-06
        %v1375 = vmax.f32 %v1311, 1e-06
        %v1376 = vmax.f32 %v1312, 1e-06
        %v1377 = vmax.f32 %v1313, 1e-06
        %v1378 = vmax.f32 %v1314, 1e-06
        %v1379 = vmax.f32 %v1315, 1e-06
        %v1380 = vmax.f32 %v1316, 1e-06
        %v1381 = vmax.f32 %v1317, 1e-06
        %v1382 = vmax.f32 %v1318, 1e-06
        %v1383 = vmax.f32 %v1319, 1e-06
        %v1384 = vmax.f32 %v1320, 1e-06
        %v1385 = vmax.f32 %v1321, 1e-06
        %v1386 = vmax.f32 %v1322, 1e-06
        %v1387 = vmax.f32 %v1323, 1e-06
        %v1388 = vmax.f32 %v1324, 1e-06
        %v1389 = vmax.f32 %v1325, 1e-06
        %v1390 = vmax.f32 %v1326, 1e-06
        %v1391 = vmax.f32 %v1327, 1e-06
        %v1392 = vmul.f32 %v1328, %v1328
        %v1393 = vmul.f32 %v1329, %v1329
        %v1394 = vmul.f32 %v1330, %v1330
        %v1395 = vmul.f32 %v1331, %v1331
        %v1396 = vmul.f32 %v1332, %v1332
        %v1397 = vmul.f32 %v1333, %v1333
        %v1398 = vmul.f32 %v1334, %v1334
        %v1399 = vmul.f32 %v1335, %v1335
        %v1400 = vmul.f32 %v1336, %v1336
        %v1401 = vmul.f32 %v1337, %v1337
        %v1402 = vmul.f32 %v1338, %v1338
        %v1403 = vmul.f32 %v1339, %v1339
        %v1404 = vmul.f32 %v1340, %v1340
        %v1405 = vmul.f32 %v1341, %v1341
        %v1406 = vmul.f32 %v1342, %v1342
        %v1407 = vmul.f32 %v1343, %v1343
        %v1408 = vmul.f32 %v1344, %v1344
        %v1409 = vmul.f32 %v1345, %v1345
        %v1410 = vmul.f32 %v1346, %v1346
        %v1411 = vmul.f32 %v1347, %v1347
        %v1412 = vmul.f32 %v1348, %v1348
        %v1413 = vmul.f32 %v1349, %v1349
        %v1414 = vmul.f32 %v1350, %v1350
        %v1415 = vmul.f32 %v1351, %v1351
        %v1416 = vmul.f32 %v1352, %v1352
        %v1417 = vmul.f32 %v1353, %v1353
        %v1418 = vmul.f32 %v1354, %v1354
        %v1419 = vmul.f32 %v1355, %v1355
        %v1420 = vmul.f32 %v1356, %v1356
        %v1421 = vmul.f32 %v1357, %v1357
        %v1422 = vmul.f32 %v1358, %v1358
        %v1423 = vmul.f32 %v1359, %v1359
        %v1424 = vmul.f32 %v1360, %v1360
        %v1425 = vmul.f32 %v1361, %v1361
        %v1426 = vmul.f32 %v1362, %v1362
        %v1427 = vmul.f32 %v1363, %v1363
        %v1428 = vmul.f32 %v1364, %v1364
        %v1429 = vmul.f32 %v1365, %v1365
        %v1430 = vmul.f32 %v1366, %v1366
        %v1431 = vmul.f32 %v1367, %v1367
        %v1432 = vmul.f32 %v1368, %v1368
        %v1433 = vmul.f32 %v1369, %v1369
        %v1434 = vmul.f32 %v1370, %v1370
        %v1435 = vmul.f32 %v1371, %v1371
        %v1436 = vmul.f32 %v1372, %v1372
        %v1437 = vmul.f32 %v1373, %v1373
        %v1438 = vmul.f32 %v1374, %v1374
        %v1439 = vmul.f32 %v1375, %v1375
        %v1440 = vmul.f32 %v1376, %v1376
        %v1441 = vmul.f32 %v1377, %v1377
        %v1442 = vmul.f32 %v1378, %v1378
        %v1443 = vmul.f32 %v1379, %v1379
        %v1444 = vmul.f32 %v1380, %v1380
        %v1445 = vmul.f32 %v1381, %v1381
        %v1446 = vmul.f32 %v1382, %v1382
        %v1447 = vmul.f32 %v1383, %v1383
        %v1448 = vmul.f32 %v1384, %v1384
        %v1449 = vmul.f32 %v1385, %v1385
        %v1450 = vmul.f32 %v1386, %v1386
        %v1451 = vmul.f32 %v1387, %v1387
        %v1452 = vmul.f32 %v1388, %v1388
        %v1453 = vmul.f32 %v1389, %v1389
        %v1454 = vmul.f32 %v1390, %v1390
        %v1455 = vmul.f32 %v1391, %v1391
        %v1456 = vmul.f32 %v1392, %v1328
        %v1457 = vmul.f32 %v1393, %v1329
        %v1458 = vmul.f32 %v1394, %v1330
        %v1459 = vmul.f32 %v1395, %v1331
        %v1460 = vmul.f32 %v1396, %v1332
        %v1461 = vmul.f32 %v1397, %v1333
        %v1462 = vmul.f32 %v1398, %v1334
        %v1463 = vmul.f32 %v1399, %v1335
        %v1464 = vmul.f32 %v1400, %v1336
        %v1465 = vmul.f32 %v1401, %v1337
        %v1466 = vmul.f32 %v1402, %v1338
        %v1467 = vmul.f32 %v1403, %v1339
        %v1468 = vmul.f32 %v1404, %v1340
        %v1469 = vmul.f32 %v1405, %v1341
        %v1470 = vmul.f32 %v1406, %v1342
        %v1471 = vmul.f32 %v1407, %v1343
        %v1472 = vmul.f32 %v1408, %v1344
        %v1473 = vmul.f32 %v1409, %v1345
        %v1474 = vmul.f32 %v1410, %v1346
        %v1475 = vmul.f32 %v1411, %v1347
        %v1476 = vmul.f32 %v1412, %v1348
        %v1477 = vmul.f32 %v1413, %v1349
        %v1478 = vmul.f32 %v1414, %v1350
        %v1479 = vmul.f32 %v1415, %v1351
        %v1480 = vmul.f32 %v1416, %v1352
        %v1481 = vmul.f32 %v1417, %v1353
        %v1482 = vmul.f32 %v1418, %v1354
        %v1483 = vmul.f32 %v1419, %v1355
        %v1484 = vmul.f32 %v1420, %v1356
        %v1485 = vmul.f32 %v1421, %v1357
        %v1486 = vmul.f32 %v1422, %v1358
        %v1487 = vmul.f32 %v1423, %v1359
        %v1488 = vmul.f32 %v1424, %v1360
        %v1489 = vmul.f32 %v1425, %v1361
        %v1490 = vmul.f32 %v1426, %v1362
        %v1491 = vmul.f32 %v1427, %v1363
        %v1492 = vmul.f32 %v1428, %v1364
        %v1493 = vmul.f32 %v1429, %v1365
        %v1494 = vmul.f32 %v1430, %v1366
        %v1495 = vmul.f32 %v1431, %v1367
        %v1496 = vmul.f32 %v1432, %v1368
        %v1497 = vmul.f32 %v1433, %v1369
        %v1498 = vmul.f32 %v1434, %v1370
        %v1499 = vmul.f32 %v1435, %v1371
        %v1500 = vmul.f32 %v1436, %v1372
        %v1501 = vmul.f32 %v1437, %v1373
        %v1502 = vmul.f32 %v1438, %v1374
        %v1503 = vmul.f32 %v1439, %v1375
        %v1504 = vmul.f32 %v1440, %v1376
        %v1505 = vmul.f32 %v1441, %v1377
        %v1506 = vmul.f32 %v1442, %v1378
        %v1507 = vmul.f32 %v1443, %v1379
        %v1508 = vmul.f32 %v1444, %v1380
        %v1509 = vmul.f32 %v1445, %v1381
        %v1510 = vmul.f32 %v1446, %v1382
        %v1511 = vmul.f32 %v1447, %v1383
        %v1512 = vmul.f32 %v1448, %v1384
        %v1513 = vmul.f32 %v1449, %v1385
        %v1514 = vmul.f32 %v1450, %v1386
        %v1515 = vmul.f32 %v1451, %v1387
        %v1516 = vmul.f32 %v1452, %v1388
        %v1517 = vmul.f32 %v1453, %v1389
        %v1518 = vmul.f32 %v1454, %v1390
        %v1519 = vmul.f32 %v1455, %v1391
        %v1520 = vadd.f32 %v1456, %v1457
        %v1521 = vadd.f32 %v1460, %v1461
        %v1522 = vadd.f32 %v1464, %v1465
        %v1523 = vadd.f32 %v1468, %v1469
        %v1524 = vadd.f32 %v1472, %v1473
        %v1525 = vadd.f32 %v1476, %v1477
        %v1526 = vadd.f32 %v1480, %v1481
        %v1527 = vadd.f32 %v1484, %v1485
        %v1528 = vadd.f32 %v1488, %v1489
        %v1529 = vadd.f32 %v1492, %v1493
        %v1530 = vadd.f32 %v1496, %v1497
        %v1531 = vadd.f32 %v1500, %v1501
        %v1532 = vadd.f32 %v1504, %v1505
        %v1533 = vadd.f32 %v1508, %v1509
        %v1534 = vadd.f32 %v1512, %v1513
        %v1535 = vadd.f32 %v1516, %v1517
        %v1536 = vadd.f32 %v1520, %v1458
        %v1537 = vadd.f32 %v1521, %v1462
        %v1538 = vadd.f32 %v1522, %v1466
        %v1539 = vadd.f32 %v1523, %v1470
        %v1540 = vadd.f32 %v1524, %v1474
        %v1541 = vadd.f32 %v1525, %v1478
        %v1542 = vadd.f32 %v1526, %v1482
        %v1543 = vadd.f32 %v1527, %v1486
        %v1544 = vadd.f32 %v1528, %v1490
        %v1545 = vadd.f32 %v1529, %v1494
        %v1546 = vadd.f32 %v1530, %v1498
        %v1547 = vadd.f32 %v1531, %v1502
        %v1548 = vadd.f32 %v1532, %v1506
        %v1549 = vadd.f32 %v1533, %v1510
        %v1550 = vadd.f32 %v1534, %v1514
        %v1551 = vadd.f32 %v1535, %v1518
        %v1552 = vadd.f32 %v1536, %v1459
        %v1553 = vadd.f32 %v1537, %v1463
        %v1554 = vadd.f32 %v1538, %v1467
        %v1555 = vadd.f32 %v1539, %v1471
        %v1556 = vadd.f32 %v1540, %v1475
        %v1557 = vadd.f32 %v1541, %v1479
        %v1558 = vadd.f32 %v1542, %v1483
        %v1559 = vadd.f32 %v1543, %v1487
        %v1560 = vadd.f32 %v1544, %v1491
        %v1561 = vadd.f32 %v1545, %v1495
        %v1562 = vadd.f32 %v1546, %v1499
        %v1563 = vadd.f32 %v1547, %v1503
        %v1564 = vadd.f32 %v1548, %v1507
        %v1565 = vadd.f32 %v1549, %v1511
        %v1566 = vadd.f32 %v1550, %v1515
        %v1567 = vadd.f32 %v1551, %v1519
        %v1568 = vld [vmem:[#allocation2] sm:$0xff]
        %v1569 = vld [vmem:[#allocation2 + $0x8] sm:$0xff]
        %v1570 = vld [vmem:[#allocation2 + $0x10] sm:$0xff]
        %v1571 = vld [vmem:[#allocation2 + $0x18] sm:$0xff]
        %v1572 = vld [vmem:[#allocation2 + $0x20] sm:$0xff]
        %v1573 = vld [vmem:[#allocation2 + $0x28] sm:$0xff]
        %v1574 = vld [vmem:[#allocation2 + $0x30] sm:$0xff]
        %v1575 = vld [vmem:[#allocation2 + $0x38] sm:$0xff]
        %v1576 = vld [vmem:[#allocation2 + $0x40] sm:$0xff]
        %v1577 = vld [vmem:[#allocation2 + $0x48] sm:$0xff]
        %v1578 = vld [vmem:[#allocation2 + $0x50] sm:$0xff]
        %v1579 = vld [vmem:[#allocation2 + $0x58] sm:$0xff]
        %v1580 = vld [vmem:[#allocation2 + $0x60] sm:$0xff]
        %v1581 = vld [vmem:[#allocation2 + $0x68] sm:$0xff]
        %v1582 = vld [vmem:[#allocation2 + $0x70] sm:$0xff]
        %v1583 = vld [vmem:[#allocation2 + $0x78] sm:$0xff]
        %v1584 = vadd.f32 %v1568, %v1552
        %v1585 = vadd.f32 %v1569, %v1553
        %v1586 = vadd.f32 %v1570, %v1554
        %v1587 = vadd.f32 %v1571, %v1555
        %v1588 = vadd.f32 %v1572, %v1556
        %v1589 = vadd.f32 %v1573, %v1557
        %v1590 = vadd.f32 %v1574, %v1558
        %v1591 = vadd.f32 %v1575, %v1559
        %v1592 = vadd.f32 %v1576, %v1560
        %v1593 = vadd.f32 %v1577, %v1561
        %v1594 = vadd.f32 %v1578, %v1562
        %v1595 = vadd.f32 %v1579, %v1563
        %v1596 = vadd.f32 %v1580, %v1564
        %v1597 = vadd.f32 %v1581, %v1565
        %v1598 = vadd.f32 %v1582, %v1566
        %v1599 = vadd.f32 %v1583, %v1567
        %1600 = vst [vmem:[#allocation2] sm:$0xff] %v1584
        %1601 = vst [vmem:[#allocation2 + $0x8] sm:$0xff] %v1585
        %1602 = vst [vmem:[#allocation2 + $0x10] sm:$0xff] %v1586
        %1603 = vst [vmem:[#allocation2 + $0x18] sm:$0xff] %v1587
        %1604 = vst [vmem:[#allocation2 + $0x20] sm:$0xff] %v1588
        %1605 = vst [vmem:[#allocation2 + $0x28] sm:$0xff] %v1589
        %1606 = vst [vmem:[#allocation2 + $0x30] sm:$0xff] %v1590
        %1607 = vst [vmem:[#allocation2 + $0x38] sm:$0xff] %v1591
        %1608 = vst [vmem:[#allocation2 + $0x40] sm:$0xff] %v1592
        %1609 = vst [vmem:[#allocation2 + $0x48] sm:$0xff] %v1593
        %1610 = vst [vmem:[#allocation2 + $0x50] sm:$0xff] %v1594
        %1611 = vst [vmem:[#allocation2 + $0x58] sm:$0xff] %v1595
        %1612 = vst [vmem:[#allocation2 + $0x60] sm:$0xff] %v1596
        %1613 = vst [vmem:[#allocation2 + $0x68] sm:$0xff] %v1597
        %1614 = vst [vmem:[#allocation2 + $0x70] sm:$0xff] %v1598
        %1615 = vst [vmem:[#allocation2 + $0x78] sm:$0xff] %v1599
        %s1616 = scalar_lea.vmem %s259, 16
        %v1617 = vld [vmem:[%s1616] sm:$0xff]
        %v1618 = vld [vmem:[%s1616 + $0x8] sm:$0xff]
        %v1621 = vlaneseq
        %v1622 = vshrl.u32 %v1621, 7
        %v1623 = vsub.s32 0, %v1622
        %v1624 = vrot.slane %v1617, %v1623
        %v1625 = vlaneseq
        %v1626 = vshrl.u32 %v1625, 7
        %v1627 = vsub.s32 4, %v1626
        %v1628 = vrot.slane %v1617, %v1627
        %v1629 = vlaneseq
        %v1630 = vshrl.u32 %v1629, 7
        %v1631 = vsub.s32 0, %v1630
        %v1632 = vrot.slane %v1618, %v1631
        %v1633 = vlaneseq
        %v1634 = vshrl.u32 %v1633, 7
        %v1635 = vsub.s32 4, %v1634
        %v1636 = vrot.slane %v1618, %v1635
        %v1641 = vlaneseq
        %v1642 = vshrl.u32 %v1641, 7
        %v1643 = vsub.s32 0, %v1642
        %v1644 = vrot.slane %v1624, %v1643
        %v1645 = vlaneseq
        %v1646 = vshrl.u32 %v1645, 7
        %v1647 = vsub.s32 0, %v1646
        %v1648 = vrot.slane %v1628, %v1647
        %v1649 = vlaneseq
        %v1650 = vshrl.u32 %v1649, 7
        %v1651 = vsub.s32 0, %v1650
        %v1652 = vrot.slane %v1632, %v1651
        %v1653 = vlaneseq
        %v1654 = vshrl.u32 %v1653, 7
        %v1655 = vsub.s32 0, %v1654
        %v1656 = vrot.slane %v1636, %v1655
        %v1657 = vmul.f32 %v321, %v1644
        %v1658 = vmul.f32 %v321, %v1648
        %v1659 = vmul.f32 %v321, %v1652
        %v1660 = vmul.f32 %v321, %v1656
        %v1661 = vmul.f32 %v326, %v1644
        %v1662 = vmul.f32 %v326, %v1648
        %v1663 = vmul.f32 %v326, %v1652
        %v1664 = vmul.f32 %v326, %v1656
        %v1665 = vmul.f32 %v331, %v1644
        %v1666 = vmul.f32 %v331, %v1648
        %v1667 = vmul.f32 %v331, %v1652
        %v1668 = vmul.f32 %v331, %v1656
        %v1669 = vmul.f32 %v336, %v1644
        %v1670 = vmul.f32 %v336, %v1648
        %v1671 = vmul.f32 %v336, %v1652
        %v1672 = vmul.f32 %v336, %v1656
        %v1673 = vmul.f32 %v341, %v1644
        %v1674 = vmul.f32 %v341, %v1648
        %v1675 = vmul.f32 %v341, %v1652
        %v1676 = vmul.f32 %v341, %v1656
        %v1677 = vmul.f32 %v346, %v1644
        %v1678 = vmul.f32 %v346, %v1648
        %v1679 = vmul.f32 %v346, %v1652
        %v1680 = vmul.f32 %v346, %v1656
        %v1681 = vmul.f32 %v351, %v1644
        %v1682 = vmul.f32 %v351, %v1648
        %v1683 = vmul.f32 %v351, %v1652
        %v1684 = vmul.f32 %v351, %v1656
        %v1685 = vmul.f32 %v356, %v1644
        %v1686 = vmul.f32 %v356, %v1648
        %v1687 = vmul.f32 %v356, %v1652
        %v1688 = vmul.f32 %v356, %v1656
        %v1689 = vmul.f32 %v361, %v1644
        %v1690 = vmul.f32 %v361, %v1648
        %v1691 = vmul.f32 %v361, %v1652
        %v1692 = vmul.f32 %v361, %v1656
        %v1693 = vmul.f32 %v366, %v1644
        %v1694 = vmul.f32 %v366, %v1648
        %v1695 = vmul.f32 %v366, %v1652
        %v1696 = vmul.f32 %v366, %v1656
        %v1697 = vmul.f32 %v371, %v1644
        %v1698 = vmul.f32 %v371, %v1648
        %v1699 = vmul.f32 %v371, %v1652
        %v1700 = vmul.f32 %v371, %v1656
        %v1701 = vmul.f32 %v376, %v1644
        %v1702 = vmul.f32 %v376, %v1648
        %v1703 = vmul.f32 %v376, %v1652
        %v1704 = vmul.f32 %v376, %v1656
        %v1705 = vmul.f32 %v381, %v1644
        %v1706 = vmul.f32 %v381, %v1648
        %v1707 = vmul.f32 %v381, %v1652
        %v1708 = vmul.f32 %v381, %v1656
        %v1709 = vmul.f32 %v386, %v1644
        %v1710 = vmul.f32 %v386, %v1648
        %v1711 = vmul.f32 %v386, %v1652
        %v1712 = vmul.f32 %v386, %v1656
        %v1713 = vmul.f32 %v391, %v1644
        %v1714 = vmul.f32 %v391, %v1648
        %v1715 = vmul.f32 %v391, %v1652
        %v1716 = vmul.f32 %v391, %v1656
        %v1717 = vmul.f32 %v396, %v1644
        %v1718 = vmul.f32 %v396, %v1648
        %v1719 = vmul.f32 %v396, %v1652
        %v1720 = vmul.f32 %v396, %v1656
        %v1721 = vadd.f32 %v503, %v1657
        %v1722 = vadd.f32 %v503, %v1658
        %v1723 = vadd.f32 %v503, %v1659
        %v1724 = vadd.f32 %v503, %v1660
        %v1725 = vadd.f32 %v508, %v1661
        %v1726 = vadd.f32 %v508, %v1662
        %v1727 = vadd.f32 %v508, %v1663
        %v1728 = vadd.f32 %v508, %v1664
        %v1729 = vadd.f32 %v513, %v1665
        %v1730 = vadd.f32 %v513, %v1666
        %v1731 = vadd.f32 %v513, %v1667
        %v1732 = vadd.f32 %v513, %v1668
        %v1733 = vadd.f32 %v518, %v1669
        %v1734 = vadd.f32 %v518, %v1670
        %v1735 = vadd.f32 %v518, %v1671
        %v1736 = vadd.f32 %v518, %v1672
        %v1737 = vadd.f32 %v523, %v1673
        %v1738 = vadd.f32 %v523, %v1674
        %v1739 = vadd.f32 %v523, %v1675
        %v1740 = vadd.f32 %v523, %v1676
        %v1741 = vadd.f32 %v528, %v1677
        %v1742 = vadd.f32 %v528, %v1678
        %v1743 = vadd.f32 %v528, %v1679
        %v1744 = vadd.f32 %v528, %v1680
        %v1745 = vadd.f32 %v533, %v1681
        %v1746 = vadd.f32 %v533, %v1682
        %v1747 = vadd.f32 %v533, %v1683
        %v1748 = vadd.f32 %v533, %v1684
        %v1749 = vadd.f32 %v538, %v1685
        %v1750 = vadd.f32 %v538, %v1686
        %v1751 = vadd.f32 %v538, %v1687
        %v1752 = vadd.f32 %v538, %v1688
        %v1753 = vadd.f32 %v543, %v1689
        %v1754 = vadd.f32 %v543, %v1690
        %v1755 = vadd.f32 %v543, %v1691
        %v1756 = vadd.f32 %v543, %v1692
        %v1757 = vadd.f32 %v548, %v1693
        %v1758 = vadd.f32 %v548, %v1694
        %v1759 = vadd.f32 %v548, %v1695
        %v1760 = vadd.f32 %v548, %v1696
        %v1761 = vadd.f32 %v553, %v1697
        %v1762 = vadd.f32 %v553, %v1698
        %v1763 = vadd.f32 %v553, %v1699
        %v1764 = vadd.f32 %v553, %v1700
        %v1765 = vadd.f32 %v558, %v1701
        %v1766 = vadd.f32 %v558, %v1702
        %v1767 = vadd.f32 %v558, %v1703
        %v1768 = vadd.f32 %v558, %v1704
        %v1769 = vadd.f32 %v563, %v1705
        %v1770 = vadd.f32 %v563, %v1706
        %v1771 = vadd.f32 %v563, %v1707
        %v1772 = vadd.f32 %v563, %v1708
        %v1773 = vadd.f32 %v568, %v1709
        %v1774 = vadd.f32 %v568, %v1710
        %v1775 = vadd.f32 %v568, %v1711
        %v1776 = vadd.f32 %v568, %v1712
        %v1777 = vadd.f32 %v573, %v1713
        %v1778 = vadd.f32 %v573, %v1714
        %v1779 = vadd.f32 %v573, %v1715
        %v1780 = vadd.f32 %v573, %v1716
        %v1781 = vadd.f32 %v578, %v1717
        %v1782 = vadd.f32 %v578, %v1718
        %v1783 = vadd.f32 %v578, %v1719
        %v1784 = vadd.f32 %v578, %v1720
        %v1785 = vlaneseq
        %v1786 = vshrl.u32 %v1785, 7
        %v1787 = vsub.s32 1, %v1786
        %v1788 = vrot.slane %v1617, %v1787
        %v1789 = vlaneseq
        %v1790 = vshrl.u32 %v1789, 7
        %v1791 = vsub.s32 5, %v1790
        %v1792 = vrot.slane %v1617, %v1791
        %v1793 = vlaneseq
        %v1794 = vshrl.u32 %v1793, 7
        %v1795 = vsub.s32 1, %v1794
        %v1796 = vrot.slane %v1618, %v1795
        %v1797 = vlaneseq
        %v1798 = vshrl.u32 %v1797, 7
        %v1799 = vsub.s32 5, %v1798
        %v1800 = vrot.slane %v1618, %v1799
        %v1805 = vlaneseq
        %v1806 = vshrl.u32 %v1805, 7
        %v1807 = vsub.s32 1, %v1806
        %v1808 = vrot.slane %v1788, %v1807
        %v1809 = vlaneseq
        %v1810 = vshrl.u32 %v1809, 7
        %v1811 = vsub.s32 1, %v1810
        %v1812 = vrot.slane %v1792, %v1811
        %v1813 = vlaneseq
        %v1814 = vshrl.u32 %v1813, 7
        %v1815 = vsub.s32 1, %v1814
        %v1816 = vrot.slane %v1796, %v1815
        %v1817 = vlaneseq
        %v1818 = vshrl.u32 %v1817, 7
        %v1819 = vsub.s32 1, %v1818
        %v1820 = vrot.slane %v1800, %v1819
        %v1821 = vmul.f32 %v646, %v1808
        %v1822 = vmul.f32 %v646, %v1812
        %v1823 = vmul.f32 %v646, %v1816
        %v1824 = vmul.f32 %v646, %v1820
        %v1825 = vmul.f32 %v650, %v1808
        %v1826 = vmul.f32 %v650, %v1812
        %v1827 = vmul.f32 %v650, %v1816
        %v1828 = vmul.f32 %v650, %v1820
        %v1829 = vmul.f32 %v654, %v1808
        %v1830 = vmul.f32 %v654, %v1812
        %v1831 = vmul.f32 %v654, %v1816
        %v1832 = vmul.f32 %v654, %v1820
        %v1833 = vmul.f32 %v658, %v1808
        %v1834 = vmul.f32 %v658, %v1812
        %v1835 = vmul.f32 %v658, %v1816
        %v1836 = vmul.f32 %v658, %v1820
        %v1837 = vmul.f32 %v662, %v1808
        %v1838 = vmul.f32 %v662, %v1812
        %v1839 = vmul.f32 %v662, %v1816
        %v1840 = vmul.f32 %v662, %v1820
        %v1841 = vmul.f32 %v666, %v1808
        %v1842 = vmul.f32 %v666, %v1812
        %v1843 = vmul.f32 %v666, %v1816
        %v1844 = vmul.f32 %v666, %v1820
        %v1845 = vmul.f32 %v670, %v1808
        %v1846 = vmul.f32 %v670, %v1812
        %v1847 = vmul.f32 %v670, %v1816
        %v1848 = vmul.f32 %v670, %v1820
        %v1849 = vmul.f32 %v674, %v1808
        %v1850 = vmul.f32 %v674, %v1812
        %v1851 = vmul.f32 %v674, %v1816
        %v1852 = vmul.f32 %v674, %v1820
        %v1853 = vmul.f32 %v678, %v1808
        %v1854 = vmul.f32 %v678, %v1812
        %v1855 = vmul.f32 %v678, %v1816
        %v1856 = vmul.f32 %v678, %v1820
        %v1857 = vmul.f32 %v682, %v1808
        %v1858 = vmul.f32 %v682, %v1812
        %v1859 = vmul.f32 %v682, %v1816
        %v1860 = vmul.f32 %v682, %v1820
        %v1861 = vmul.f32 %v686, %v1808
        %v1862 = vmul.f32 %v686, %v1812
        %v1863 = vmul.f32 %v686, %v1816
        %v1864 = vmul.f32 %v686, %v1820
        %v1865 = vmul.f32 %v690, %v1808
        %v1866 = vmul.f32 %v690, %v1812
        %v1867 = vmul.f32 %v690, %v1816
        %v1868 = vmul.f32 %v690, %v1820
        %v1869 = vmul.f32 %v694, %v1808
        %v1870 = vmul.f32 %v694, %v1812
        %v1871 = vmul.f32 %v694, %v1816
        %v1872 = vmul.f32 %v694, %v1820
        %v1873 = vmul.f32 %v698, %v1808
        %v1874 = vmul.f32 %v698, %v1812
        %v1875 = vmul.f32 %v698, %v1816
        %v1876 = vmul.f32 %v698, %v1820
        %v1877 = vmul.f32 %v702, %v1808
        %v1878 = vmul.f32 %v702, %v1812
        %v1879 = vmul.f32 %v702, %v1816
        %v1880 = vmul.f32 %v702, %v1820
        %v1881 = vmul.f32 %v706, %v1808
        %v1882 = vmul.f32 %v706, %v1812
        %v1883 = vmul.f32 %v706, %v1816
        %v1884 = vmul.f32 %v706, %v1820
        %v1885 = vadd.f32 %v1721, %v1821
        %v1886 = vadd.f32 %v1722, %v1822
        %v1887 = vadd.f32 %v1723, %v1823
        %v1888 = vadd.f32 %v1724, %v1824
        %v1889 = vadd.f32 %v1725, %v1825
        %v1890 = vadd.f32 %v1726, %v1826
        %v1891 = vadd.f32 %v1727, %v1827
        %v1892 = vadd.f32 %v1728, %v1828
        %v1893 = vadd.f32 %v1729, %v1829
        %v1894 = vadd.f32 %v1730, %v1830
        %v1895 = vadd.f32 %v1731, %v1831
        %v1896 = vadd.f32 %v1732, %v1832
        %v1897 = vadd.f32 %v1733, %v1833
        %v1898 = vadd.f32 %v1734, %v1834
        %v1899 = vadd.f32 %v1735, %v1835
        %v1900 = vadd.f32 %v1736, %v1836
        %v1901 = vadd.f32 %v1737, %v1837
        %v1902 = vadd.f32 %v1738, %v1838
        %v1903 = vadd.f32 %v1739, %v1839
        %v1904 = vadd.f32 %v1740, %v1840
        %v1905 = vadd.f32 %v1741, %v1841
        %v1906 = vadd.f32 %v1742, %v1842
        %v1907 = vadd.f32 %v1743, %v1843
        %v1908 = vadd.f32 %v1744, %v1844
        %v1909 = vadd.f32 %v1745, %v1845
        %v1910 = vadd.f32 %v1746, %v1846
        %v1911 = vadd.f32 %v1747, %v1847
        %v1912 = vadd.f32 %v1748, %v1848
        %v1913 = vadd.f32 %v1749, %v1849
        %v1914 = vadd.f32 %v1750, %v1850
        %v1915 = vadd.f32 %v1751, %v1851
        %v1916 = vadd.f32 %v1752, %v1852
        %v1917 = vadd.f32 %v1753, %v1853
        %v1918 = vadd.f32 %v1754, %v1854
        %v1919 = vadd.f32 %v1755, %v1855
        %v1920 = vadd.f32 %v1756, %v1856
        %v1921 = vadd.f32 %v1757, %v1857
        %v1922 = vadd.f32 %v1758, %v1858
        %v1923 = vadd.f32 %v1759, %v1859
        %v1924 = vadd.f32 %v1760, %v1860
        %v1925 = vadd.f32 %v1761, %v1861
        %v1926 = vadd.f32 %v1762, %v1862
        %v1927 = vadd.f32 %v1763, %v1863
        %v1928 = vadd.f32 %v1764, %v1864
        %v1929 = vadd.f32 %v1765, %v1865
        %v1930 = vadd.f32 %v1766, %v1866
        %v1931 = vadd.f32 %v1767, %v1867
        %v1932 = vadd.f32 %v1768, %v1868
        %v1933 = vadd.f32 %v1769, %v1869
        %v1934 = vadd.f32 %v1770, %v1870
        %v1935 = vadd.f32 %v1771, %v1871
        %v1936 = vadd.f32 %v1772, %v1872
        %v1937 = vadd.f32 %v1773, %v1873
        %v1938 = vadd.f32 %v1774, %v1874
        %v1939 = vadd.f32 %v1775, %v1875
        %v1940 = vadd.f32 %v1776, %v1876
        %v1941 = vadd.f32 %v1777, %v1877
        %v1942 = vadd.f32 %v1778, %v1878
        %v1943 = vadd.f32 %v1779, %v1879
        %v1944 = vadd.f32 %v1780, %v1880
        %v1945 = vadd.f32 %v1781, %v1881
        %v1946 = vadd.f32 %v1782, %v1882
        %v1947 = vadd.f32 %v1783, %v1883
        %v1948 = vadd.f32 %v1784, %v1884
        %v1949 = vlaneseq
        %v1950 = vshrl.u32 %v1949, 7
        %v1951 = vsub.s32 2, %v1950
        %v1952 = vrot.slane %v1617, %v1951
        %v1953 = vlaneseq
        %v1954 = vshrl.u32 %v1953, 7
        %v1955 = vsub.s32 6, %v1954
        %v1956 = vrot.slane %v1617, %v1955
        %v1957 = vlaneseq
        %v1958 = vshrl.u32 %v1957, 7
        %v1959 = vsub.s32 2, %v1958
        %v1960 = vrot.slane %v1618, %v1959
        %v1961 = vlaneseq
        %v1962 = vshrl.u32 %v1961, 7
        %v1963 = vsub.s32 6, %v1962
        %v1964 = vrot.slane %v1618, %v1963
        %v1969 = vlaneseq
        %v1970 = vshrl.u32 %v1969, 7
        %v1971 = vsub.s32 2, %v1970
        %v1972 = vrot.slane %v1952, %v1971
        %v1973 = vlaneseq
        %v1974 = vshrl.u32 %v1973, 7
        %v1975 = vsub.s32 2, %v1974
        %v1976 = vrot.slane %v1956, %v1975
        %v1977 = vlaneseq
        %v1978 = vshrl.u32 %v1977, 7
        %v1979 = vsub.s32 2, %v1978
        %v1980 = vrot.slane %v1960, %v1979
        %v1981 = vlaneseq
        %v1982 = vshrl.u32 %v1981, 7
        %v1983 = vsub.s32 2, %v1982
        %v1984 = vrot.slane %v1964, %v1983
        %v1985 = vmul.f32 %v874, %v1972
        %v1986 = vmul.f32 %v874, %v1976
        %v1987 = vmul.f32 %v874, %v1980
        %v1988 = vmul.f32 %v874, %v1984
        %v1989 = vmul.f32 %v878, %v1972
        %v1990 = vmul.f32 %v878, %v1976
        %v1991 = vmul.f32 %v878, %v1980
        %v1992 = vmul.f32 %v878, %v1984
        %v1993 = vmul.f32 %v882, %v1972
        %v1994 = vmul.f32 %v882, %v1976
        %v1995 = vmul.f32 %v882, %v1980
        %v1996 = vmul.f32 %v882, %v1984
        %v1997 = vmul.f32 %v886, %v1972
        %v1998 = vmul.f32 %v886, %v1976
        %v1999 = vmul.f32 %v886, %v1980
        %v2000 = vmul.f32 %v886, %v1984
        %v2001 = vmul.f32 %v890, %v1972
        %v2002 = vmul.f32 %v890, %v1976
        %v2003 = vmul.f32 %v890, %v1980
        %v2004 = vmul.f32 %v890, %v1984
        %v2005 = vmul.f32 %v894, %v1972
        %v2006 = vmul.f32 %v894, %v1976
        %v2007 = vmul.f32 %v894, %v1980
        %v2008 = vmul.f32 %v894, %v1984
        %v2009 = vmul.f32 %v898, %v1972
        %v2010 = vmul.f32 %v898, %v1976
        %v2011 = vmul.f32 %v898, %v1980
        %v2012 = vmul.f32 %v898, %v1984
        %v2013 = vmul.f32 %v902, %v1972
        %v2014 = vmul.f32 %v902, %v1976
        %v2015 = vmul.f32 %v902, %v1980
        %v2016 = vmul.f32 %v902, %v1984
        %v2017 = vmul.f32 %v906, %v1972
        %v2018 = vmul.f32 %v906, %v1976
        %v2019 = vmul.f32 %v906, %v1980
        %v2020 = vmul.f32 %v906, %v1984
        %v2021 = vmul.f32 %v910, %v1972
        %v2022 = vmul.f32 %v910, %v1976
        %v2023 = vmul.f32 %v910, %v1980
        %v2024 = vmul.f32 %v910, %v1984
        %v2025 = vmul.f32 %v914, %v1972
        %v2026 = vmul.f32 %v914, %v1976
        %v2027 = vmul.f32 %v914, %v1980
        %v2028 = vmul.f32 %v914, %v1984
        %v2029 = vmul.f32 %v918, %v1972
        %v2030 = vmul.f32 %v918, %v1976
        %v2031 = vmul.f32 %v918, %v1980
        %v2032 = vmul.f32 %v918, %v1984
        %v2033 = vmul.f32 %v922, %v1972
        %v2034 = vmul.f32 %v922, %v1976
        %v2035 = vmul.f32 %v922, %v1980
        %v2036 = vmul.f32 %v922, %v1984
        %v2037 = vmul.f32 %v926, %v1972
        %v2038 = vmul.f32 %v926, %v1976
        %v2039 = vmul.f32 %v926, %v1980
        %v2040 = vmul.f32 %v926, %v1984
        %v2041 = vmul.f32 %v930, %v1972
        %v2042 = vmul.f32 %v930, %v1976
        %v2043 = vmul.f32 %v930, %v1980
        %v2044 = vmul.f32 %v930, %v1984
        %v2045 = vmul.f32 %v934, %v1972
        %v2046 = vmul.f32 %v934, %v1976
        %v2047 = vmul.f32 %v934, %v1980
        %v2048 = vmul.f32 %v934, %v1984
        %v2049 = vadd.f32 %v1885, %v1985
        %v2050 = vadd.f32 %v1886, %v1986
        %v2051 = vadd.f32 %v1887, %v1987
        %v2052 = vadd.f32 %v1888, %v1988
        %v2053 = vadd.f32 %v1889, %v1989
        %v2054 = vadd.f32 %v1890, %v1990
        %v2055 = vadd.f32 %v1891, %v1991
        %v2056 = vadd.f32 %v1892, %v1992
        %v2057 = vadd.f32 %v1893, %v1993
        %v2058 = vadd.f32 %v1894, %v1994
        %v2059 = vadd.f32 %v1895, %v1995
        %v2060 = vadd.f32 %v1896, %v1996
        %v2061 = vadd.f32 %v1897, %v1997
        %v2062 = vadd.f32 %v1898, %v1998
        %v2063 = vadd.f32 %v1899, %v1999
        %v2064 = vadd.f32 %v1900, %v2000
        %v2065 = vadd.f32 %v1901, %v2001
        %v2066 = vadd.f32 %v1902, %v2002
        %v2067 = vadd.f32 %v1903, %v2003
        %v2068 = vadd.f32 %v1904, %v2004
        %v2069 = vadd.f32 %v1905, %v2005
        %v2070 = vadd.f32 %v1906, %v2006
        %v2071 = vadd.f32 %v1907, %v2007
        %v2072 = vadd.f32 %v1908, %v2008
        %v2073 = vadd.f32 %v1909, %v2009
        %v2074 = vadd.f32 %v1910, %v2010
        %v2075 = vadd.f32 %v1911, %v2011
        %v2076 = vadd.f32 %v1912, %v2012
        %v2077 = vadd.f32 %v1913, %v2013
        %v2078 = vadd.f32 %v1914, %v2014
        %v2079 = vadd.f32 %v1915, %v2015
        %v2080 = vadd.f32 %v1916, %v2016
        %v2081 = vadd.f32 %v1917, %v2017
        %v2082 = vadd.f32 %v1918, %v2018
        %v2083 = vadd.f32 %v1919, %v2019
        %v2084 = vadd.f32 %v1920, %v2020
        %v2085 = vadd.f32 %v1921, %v2021
        %v2086 = vadd.f32 %v1922, %v2022
        %v2087 = vadd.f32 %v1923, %v2023
        %v2088 = vadd.f32 %v1924, %v2024
        %v2089 = vadd.f32 %v1925, %v2025
        %v2090 = vadd.f32 %v1926, %v2026
        %v2091 = vadd.f32 %v1927, %v2027
        %v2092 = vadd.f32 %v1928, %v2028
        %v2093 = vadd.f32 %v1929, %v2029
        %v2094 = vadd.f32 %v1930, %v2030
        %v2095 = vadd.f32 %v1931, %v2031
        %v2096 = vadd.f32 %v1932, %v2032
        %v2097 = vadd.f32 %v1933, %v2033
        %v2098 = vadd.f32 %v1934, %v2034
        %v2099 = vadd.f32 %v1935, %v2035
        %v2100 = vadd.f32 %v1936, %v2036
        %v2101 = vadd.f32 %v1937, %v2037
        %v2102 = vadd.f32 %v1938, %v2038
        %v2103 = vadd.f32 %v1939, %v2039
        %v2104 = vadd.f32 %v1940, %v2040
        %v2105 = vadd.f32 %v1941, %v2041
        %v2106 = vadd.f32 %v1942, %v2042
        %v2107 = vadd.f32 %v1943, %v2043
        %v2108 = vadd.f32 %v1944, %v2044
        %v2109 = vadd.f32 %v1945, %v2045
        %v2110 = vadd.f32 %v1946, %v2046
        %v2111 = vadd.f32 %v1947, %v2047
        %v2112 = vadd.f32 %v1948, %v2048
        %v2113 = vlaneseq
        %v2114 = vshrl.u32 %v2113, 7
        %v2115 = vsub.s32 3, %v2114
        %v2116 = vrot.slane %v1617, %v2115
        %v2117 = vlaneseq
        %v2118 = vshrl.u32 %v2117, 7
        %v2119 = vsub.s32 7, %v2118
        %v2120 = vrot.slane %v1617, %v2119
        %v2121 = vlaneseq
        %v2122 = vshrl.u32 %v2121, 7
        %v2123 = vsub.s32 3, %v2122
        %v2124 = vrot.slane %v1618, %v2123
        %v2125 = vlaneseq
        %v2126 = vshrl.u32 %v2125, 7
        %v2127 = vsub.s32 7, %v2126
        %v2128 = vrot.slane %v1618, %v2127
        %v2133 = vlaneseq
        %v2134 = vshrl.u32 %v2133, 7
        %v2135 = vsub.s32 3, %v2134
        %v2136 = vrot.slane %v2116, %v2135
        %v2137 = vlaneseq
        %v2138 = vshrl.u32 %v2137, 7
        %v2139 = vsub.s32 3, %v2138
        %v2140 = vrot.slane %v2120, %v2139
        %v2141 = vlaneseq
        %v2142 = vshrl.u32 %v2141, 7
        %v2143 = vsub.s32 3, %v2142
        %v2144 = vrot.slane %v2124, %v2143
        %v2145 = vlaneseq
        %v2146 = vshrl.u32 %v2145, 7
        %v2147 = vsub.s32 3, %v2146
        %v2148 = vrot.slane %v2128, %v2147
        %v2149 = vmul.f32 %v1102, %v2136
        %v2150 = vmul.f32 %v1102, %v2140
        %v2151 = vmul.f32 %v1102, %v2144
        %v2152 = vmul.f32 %v1102, %v2148
        %v2153 = vmul.f32 %v1106, %v2136
        %v2154 = vmul.f32 %v1106, %v2140
        %v2155 = vmul.f32 %v1106, %v2144
        %v2156 = vmul.f32 %v1106, %v2148
        %v2157 = vmul.f32 %v1110, %v2136
        %v2158 = vmul.f32 %v1110, %v2140
        %v2159 = vmul.f32 %v1110, %v2144
        %v2160 = vmul.f32 %v1110, %v2148
        %v2161 = vmul.f32 %v1114, %v2136
        %v2162 = vmul.f32 %v1114, %v2140
        %v2163 = vmul.f32 %v1114, %v2144
        %v2164 = vmul.f32 %v1114, %v2148
        %v2165 = vmul.f32 %v1118, %v2136
        %v2166 = vmul.f32 %v1118, %v2140
        %v2167 = vmul.f32 %v1118, %v2144
        %v2168 = vmul.f32 %v1118, %v2148
        %v2169 = vmul.f32 %v1122, %v2136
        %v2170 = vmul.f32 %v1122, %v2140
        %v2171 = vmul.f32 %v1122, %v2144
        %v2172 = vmul.f32 %v1122, %v2148
        %v2173 = vmul.f32 %v1126, %v2136
        %v2174 = vmul.f32 %v1126, %v2140
        %v2175 = vmul.f32 %v1126, %v2144
        %v2176 = vmul.f32 %v1126, %v2148
        %v2177 = vmul.f32 %v1130, %v2136
        %v2178 = vmul.f32 %v1130, %v2140
        %v2179 = vmul.f32 %v1130, %v2144
        %v2180 = vmul.f32 %v1130, %v2148
        %v2181 = vmul.f32 %v1134, %v2136
        %v2182 = vmul.f32 %v1134, %v2140
        %v2183 = vmul.f32 %v1134, %v2144
        %v2184 = vmul.f32 %v1134, %v2148
        %v2185 = vmul.f32 %v1138, %v2136
        %v2186 = vmul.f32 %v1138, %v2140
        %v2187 = vmul.f32 %v1138, %v2144
        %v2188 = vmul.f32 %v1138, %v2148
        %v2189 = vmul.f32 %v1142, %v2136
        %v2190 = vmul.f32 %v1142, %v2140
        %v2191 = vmul.f32 %v1142, %v2144
        %v2192 = vmul.f32 %v1142, %v2148
        %v2193 = vmul.f32 %v1146, %v2136
        %v2194 = vmul.f32 %v1146, %v2140
        %v2195 = vmul.f32 %v1146, %v2144
        %v2196 = vmul.f32 %v1146, %v2148
        %v2197 = vmul.f32 %v1150, %v2136
        %v2198 = vmul.f32 %v1150, %v2140
        %v2199 = vmul.f32 %v1150, %v2144
        %v2200 = vmul.f32 %v1150, %v2148
        %v2201 = vmul.f32 %v1154, %v2136
        %v2202 = vmul.f32 %v1154, %v2140
        %v2203 = vmul.f32 %v1154, %v2144
        %v2204 = vmul.f32 %v1154, %v2148
        %v2205 = vmul.f32 %v1158, %v2136
        %v2206 = vmul.f32 %v1158, %v2140
        %v2207 = vmul.f32 %v1158, %v2144
        %v2208 = vmul.f32 %v1158, %v2148
        %v2209 = vmul.f32 %v1162, %v2136
        %v2210 = vmul.f32 %v1162, %v2140
        %v2211 = vmul.f32 %v1162, %v2144
        %v2212 = vmul.f32 %v1162, %v2148
        %v2213 = vadd.f32 %v2049, %v2149
        %v2214 = vadd.f32 %v2050, %v2150
        %v2215 = vadd.f32 %v2051, %v2151
        %v2216 = vadd.f32 %v2052, %v2152
        %v2217 = vadd.f32 %v2053, %v2153
        %v2218 = vadd.f32 %v2054, %v2154
        %v2219 = vadd.f32 %v2055, %v2155
        %v2220 = vadd.f32 %v2056, %v2156
        %v2221 = vadd.f32 %v2057, %v2157
        %v2222 = vadd.f32 %v2058, %v2158
        %v2223 = vadd.f32 %v2059, %v2159
        %v2224 = vadd.f32 %v2060, %v2160
        %v2225 = vadd.f32 %v2061, %v2161
        %v2226 = vadd.f32 %v2062, %v2162
        %v2227 = vadd.f32 %v2063, %v2163
        %v2228 = vadd.f32 %v2064, %v2164
        %v2229 = vadd.f32 %v2065, %v2165
        %v2230 = vadd.f32 %v2066, %v2166
        %v2231 = vadd.f32 %v2067, %v2167
        %v2232 = vadd.f32 %v2068, %v2168
        %v2233 = vadd.f32 %v2069, %v2169
        %v2234 = vadd.f32 %v2070, %v2170
        %v2235 = vadd.f32 %v2071, %v2171
        %v2236 = vadd.f32 %v2072, %v2172
        %v2237 = vadd.f32 %v2073, %v2173
        %v2238 = vadd.f32 %v2074, %v2174
        %v2239 = vadd.f32 %v2075, %v2175
        %v2240 = vadd.f32 %v2076, %v2176
        %v2241 = vadd.f32 %v2077, %v2177
        %v2242 = vadd.f32 %v2078, %v2178
        %v2243 = vadd.f32 %v2079, %v2179
        %v2244 = vadd.f32 %v2080, %v2180
        %v2245 = vadd.f32 %v2081, %v2181
        %v2246 = vadd.f32 %v2082, %v2182
        %v2247 = vadd.f32 %v2083, %v2183
        %v2248 = vadd.f32 %v2084, %v2184
        %v2249 = vadd.f32 %v2085, %v2185
        %v2250 = vadd.f32 %v2086, %v2186
        %v2251 = vadd.f32 %v2087, %v2187
        %v2252 = vadd.f32 %v2088, %v2188
        %v2253 = vadd.f32 %v2089, %v2189
        %v2254 = vadd.f32 %v2090, %v2190
        %v2255 = vadd.f32 %v2091, %v2191
        %v2256 = vadd.f32 %v2092, %v2192
        %v2257 = vadd.f32 %v2093, %v2193
        %v2258 = vadd.f32 %v2094, %v2194
        %v2259 = vadd.f32 %v2095, %v2195
        %v2260 = vadd.f32 %v2096, %v2196
        %v2261 = vadd.f32 %v2097, %v2197
        %v2262 = vadd.f32 %v2098, %v2198
        %v2263 = vadd.f32 %v2099, %v2199
        %v2264 = vadd.f32 %v2100, %v2200
        %v2265 = vadd.f32 %v2101, %v2201
        %v2266 = vadd.f32 %v2102, %v2202
        %v2267 = vadd.f32 %v2103, %v2203
        %v2268 = vadd.f32 %v2104, %v2204
        %v2269 = vadd.f32 %v2105, %v2205
        %v2270 = vadd.f32 %v2106, %v2206
        %v2271 = vadd.f32 %v2107, %v2207
        %v2272 = vadd.f32 %v2108, %v2208
        %v2273 = vadd.f32 %v2109, %v2209
        %v2274 = vadd.f32 %v2110, %v2210
        %v2275 = vadd.f32 %v2111, %v2211
        %v2276 = vadd.f32 %v2112, %v2212
        %v2277 = vmax.f32 %v2213, 1e-06
        %v2278 = vmax.f32 %v2214, 1e-06
        %v2279 = vmax.f32 %v2215, 1e-06
        %v2280 = vmax.f32 %v2216, 1e-06
        %v2281 = vmax.f32 %v2217, 1e-06
        %v2282 = vmax.f32 %v2218, 1e-06
        %v2283 = vmax.f32 %v2219, 1e-06
        %v2284 = vmax.f32 %v2220, 1e-06
        %v2285 = vmax.f32 %v2221, 1e-06
        %v2286 = vmax.f32 %v2222, 1e-06
        %v2287 = vmax.f32 %v2223, 1e-06
        %v2288 = vmax.f32 %v2224, 1e-06
        %v2289 = vmax.f32 %v2225, 1e-06
        %v2290 = vmax.f32 %v2226, 1e-06
        %v2291 = vmax.f32 %v2227, 1e-06
        %v2292 = vmax.f32 %v2228, 1e-06
        %v2293 = vmax.f32 %v2229, 1e-06
        %v2294 = vmax.f32 %v2230, 1e-06
        %v2295 = vmax.f32 %v2231, 1e-06
        %v2296 = vmax.f32 %v2232, 1e-06
        %v2297 = vmax.f32 %v2233, 1e-06
        %v2298 = vmax.f32 %v2234, 1e-06
        %v2299 = vmax.f32 %v2235, 1e-06
        %v2300 = vmax.f32 %v2236, 1e-06
        %v2301 = vmax.f32 %v2237, 1e-06
        %v2302 = vmax.f32 %v2238, 1e-06
        %v2303 = vmax.f32 %v2239, 1e-06
        %v2304 = vmax.f32 %v2240, 1e-06
        %v2305 = vmax.f32 %v2241, 1e-06
        %v2306 = vmax.f32 %v2242, 1e-06
        %v2307 = vmax.f32 %v2243, 1e-06
        %v2308 = vmax.f32 %v2244, 1e-06
        %v2309 = vmax.f32 %v2245, 1e-06
        %v2310 = vmax.f32 %v2246, 1e-06
        %v2311 = vmax.f32 %v2247, 1e-06
        %v2312 = vmax.f32 %v2248, 1e-06
        %v2313 = vmax.f32 %v2249, 1e-06
        %v2314 = vmax.f32 %v2250, 1e-06
        %v2315 = vmax.f32 %v2251, 1e-06
        %v2316 = vmax.f32 %v2252, 1e-06
        %v2317 = vmax.f32 %v2253, 1e-06
        %v2318 = vmax.f32 %v2254, 1e-06
        %v2319 = vmax.f32 %v2255, 1e-06
        %v2320 = vmax.f32 %v2256, 1e-06
        %v2321 = vmax.f32 %v2257, 1e-06
        %v2322 = vmax.f32 %v2258, 1e-06
        %v2323 = vmax.f32 %v2259, 1e-06
        %v2324 = vmax.f32 %v2260, 1e-06
        %v2325 = vmax.f32 %v2261, 1e-06
        %v2326 = vmax.f32 %v2262, 1e-06
        %v2327 = vmax.f32 %v2263, 1e-06
        %v2328 = vmax.f32 %v2264, 1e-06
        %v2329 = vmax.f32 %v2265, 1e-06
        %v2330 = vmax.f32 %v2266, 1e-06
        %v2331 = vmax.f32 %v2267, 1e-06
        %v2332 = vmax.f32 %v2268, 1e-06
        %v2333 = vmax.f32 %v2269, 1e-06
        %v2334 = vmax.f32 %v2270, 1e-06
        %v2335 = vmax.f32 %v2271, 1e-06
        %v2336 = vmax.f32 %v2272, 1e-06
        %v2337 = vmax.f32 %v2273, 1e-06
        %v2338 = vmax.f32 %v2274, 1e-06
        %v2339 = vmax.f32 %v2275, 1e-06
        %v2340 = vmax.f32 %v2276, 1e-06
        %v2341 = vmul.f32 %v2277, %v2277
        %v2342 = vmul.f32 %v2278, %v2278
        %v2343 = vmul.f32 %v2279, %v2279
        %v2344 = vmul.f32 %v2280, %v2280
        %v2345 = vmul.f32 %v2281, %v2281
        %v2346 = vmul.f32 %v2282, %v2282
        %v2347 = vmul.f32 %v2283, %v2283
        %v2348 = vmul.f32 %v2284, %v2284
        %v2349 = vmul.f32 %v2285, %v2285
        %v2350 = vmul.f32 %v2286, %v2286
        %v2351 = vmul.f32 %v2287, %v2287
        %v2352 = vmul.f32 %v2288, %v2288
        %v2353 = vmul.f32 %v2289, %v2289
        %v2354 = vmul.f32 %v2290, %v2290
        %v2355 = vmul.f32 %v2291, %v2291
        %v2356 = vmul.f32 %v2292, %v2292
        %v2357 = vmul.f32 %v2293, %v2293
        %v2358 = vmul.f32 %v2294, %v2294
        %v2359 = vmul.f32 %v2295, %v2295
        %v2360 = vmul.f32 %v2296, %v2296
        %v2361 = vmul.f32 %v2297, %v2297
        %v2362 = vmul.f32 %v2298, %v2298
        %v2363 = vmul.f32 %v2299, %v2299
        %v2364 = vmul.f32 %v2300, %v2300
        %v2365 = vmul.f32 %v2301, %v2301
        %v2366 = vmul.f32 %v2302, %v2302
        %v2367 = vmul.f32 %v2303, %v2303
        %v2368 = vmul.f32 %v2304, %v2304
        %v2369 = vmul.f32 %v2305, %v2305
        %v2370 = vmul.f32 %v2306, %v2306
        %v2371 = vmul.f32 %v2307, %v2307
        %v2372 = vmul.f32 %v2308, %v2308
        %v2373 = vmul.f32 %v2309, %v2309
        %v2374 = vmul.f32 %v2310, %v2310
        %v2375 = vmul.f32 %v2311, %v2311
        %v2376 = vmul.f32 %v2312, %v2312
        %v2377 = vmul.f32 %v2313, %v2313
        %v2378 = vmul.f32 %v2314, %v2314
        %v2379 = vmul.f32 %v2315, %v2315
        %v2380 = vmul.f32 %v2316, %v2316
        %v2381 = vmul.f32 %v2317, %v2317
        %v2382 = vmul.f32 %v2318, %v2318
        %v2383 = vmul.f32 %v2319, %v2319
        %v2384 = vmul.f32 %v2320, %v2320
        %v2385 = vmul.f32 %v2321, %v2321
        %v2386 = vmul.f32 %v2322, %v2322
        %v2387 = vmul.f32 %v2323, %v2323
        %v2388 = vmul.f32 %v2324, %v2324
        %v2389 = vmul.f32 %v2325, %v2325
        %v2390 = vmul.f32 %v2326, %v2326
        %v2391 = vmul.f32 %v2327, %v2327
        %v2392 = vmul.f32 %v2328, %v2328
        %v2393 = vmul.f32 %v2329, %v2329
        %v2394 = vmul.f32 %v2330, %v2330
        %v2395 = vmul.f32 %v2331, %v2331
        %v2396 = vmul.f32 %v2332, %v2332
        %v2397 = vmul.f32 %v2333, %v2333
        %v2398 = vmul.f32 %v2334, %v2334
        %v2399 = vmul.f32 %v2335, %v2335
        %v2400 = vmul.f32 %v2336, %v2336
        %v2401 = vmul.f32 %v2337, %v2337
        %v2402 = vmul.f32 %v2338, %v2338
        %v2403 = vmul.f32 %v2339, %v2339
        %v2404 = vmul.f32 %v2340, %v2340
        %v2405 = vmul.f32 %v2341, %v2277
        %v2406 = vmul.f32 %v2342, %v2278
        %v2407 = vmul.f32 %v2343, %v2279
        %v2408 = vmul.f32 %v2344, %v2280
        %v2409 = vmul.f32 %v2345, %v2281
        %v2410 = vmul.f32 %v2346, %v2282
        %v2411 = vmul.f32 %v2347, %v2283
        %v2412 = vmul.f32 %v2348, %v2284
        %v2413 = vmul.f32 %v2349, %v2285
        %v2414 = vmul.f32 %v2350, %v2286
        %v2415 = vmul.f32 %v2351, %v2287
        %v2416 = vmul.f32 %v2352, %v2288
        %v2417 = vmul.f32 %v2353, %v2289
        %v2418 = vmul.f32 %v2354, %v2290
        %v2419 = vmul.f32 %v2355, %v2291
        %v2420 = vmul.f32 %v2356, %v2292
        %v2421 = vmul.f32 %v2357, %v2293
        %v2422 = vmul.f32 %v2358, %v2294
        %v2423 = vmul.f32 %v2359, %v2295
        %v2424 = vmul.f32 %v2360, %v2296
        %v2425 = vmul.f32 %v2361, %v2297
        %v2426 = vmul.f32 %v2362, %v2298
        %v2427 = vmul.f32 %v2363, %v2299
        %v2428 = vmul.f32 %v2364, %v2300
        %v2429 = vmul.f32 %v2365, %v2301
        %v2430 = vmul.f32 %v2366, %v2302
        %v2431 = vmul.f32 %v2367, %v2303
        %v2432 = vmul.f32 %v2368, %v2304
        %v2433 = vmul.f32 %v2369, %v2305
        %v2434 = vmul.f32 %v2370, %v2306
        %v2435 = vmul.f32 %v2371, %v2307
        %v2436 = vmul.f32 %v2372, %v2308
        %v2437 = vmul.f32 %v2373, %v2309
        %v2438 = vmul.f32 %v2374, %v2310
        %v2439 = vmul.f32 %v2375, %v2311
        %v2440 = vmul.f32 %v2376, %v2312
        %v2441 = vmul.f32 %v2377, %v2313
        %v2442 = vmul.f32 %v2378, %v2314
        %v2443 = vmul.f32 %v2379, %v2315
        %v2444 = vmul.f32 %v2380, %v2316
        %v2445 = vmul.f32 %v2381, %v2317
        %v2446 = vmul.f32 %v2382, %v2318
        %v2447 = vmul.f32 %v2383, %v2319
        %v2448 = vmul.f32 %v2384, %v2320
        %v2449 = vmul.f32 %v2385, %v2321
        %v2450 = vmul.f32 %v2386, %v2322
        %v2451 = vmul.f32 %v2387, %v2323
        %v2452 = vmul.f32 %v2388, %v2324
        %v2453 = vmul.f32 %v2389, %v2325
        %v2454 = vmul.f32 %v2390, %v2326
        %v2455 = vmul.f32 %v2391, %v2327
        %v2456 = vmul.f32 %v2392, %v2328
        %v2457 = vmul.f32 %v2393, %v2329
        %v2458 = vmul.f32 %v2394, %v2330
        %v2459 = vmul.f32 %v2395, %v2331
        %v2460 = vmul.f32 %v2396, %v2332
        %v2461 = vmul.f32 %v2397, %v2333
        %v2462 = vmul.f32 %v2398, %v2334
        %v2463 = vmul.f32 %v2399, %v2335
        %v2464 = vmul.f32 %v2400, %v2336
        %v2465 = vmul.f32 %v2401, %v2337
        %v2466 = vmul.f32 %v2402, %v2338
        %v2467 = vmul.f32 %v2403, %v2339
        %v2468 = vmul.f32 %v2404, %v2340
        %v2469 = vadd.f32 %v2405, %v2406
        %v2470 = vadd.f32 %v2409, %v2410
        %v2471 = vadd.f32 %v2413, %v2414
        %v2472 = vadd.f32 %v2417, %v2418
        %v2473 = vadd.f32 %v2421, %v2422
        %v2474 = vadd.f32 %v2425, %v2426
        %v2475 = vadd.f32 %v2429, %v2430
        %v2476 = vadd.f32 %v2433, %v2434
        %v2477 = vadd.f32 %v2437, %v2438
        %v2478 = vadd.f32 %v2441, %v2442
        %v2479 = vadd.f32 %v2445, %v2446
        %v2480 = vadd.f32 %v2449, %v2450
        %v2481 = vadd.f32 %v2453, %v2454
        %v2482 = vadd.f32 %v2457, %v2458
        %v2483 = vadd.f32 %v2461, %v2462
        %v2484 = vadd.f32 %v2465, %v2466
        %v2485 = vadd.f32 %v2469, %v2407
        %v2486 = vadd.f32 %v2470, %v2411
        %v2487 = vadd.f32 %v2471, %v2415
        %v2488 = vadd.f32 %v2472, %v2419
        %v2489 = vadd.f32 %v2473, %v2423
        %v2490 = vadd.f32 %v2474, %v2427
        %v2491 = vadd.f32 %v2475, %v2431
        %v2492 = vadd.f32 %v2476, %v2435
        %v2493 = vadd.f32 %v2477, %v2439
        %v2494 = vadd.f32 %v2478, %v2443
        %v2495 = vadd.f32 %v2479, %v2447
        %v2496 = vadd.f32 %v2480, %v2451
        %v2497 = vadd.f32 %v2481, %v2455
        %v2498 = vadd.f32 %v2482, %v2459
        %v2499 = vadd.f32 %v2483, %v2463
        %v2500 = vadd.f32 %v2484, %v2467
        %v2501 = vadd.f32 %v2485, %v2408
        %v2502 = vadd.f32 %v2486, %v2412
        %v2503 = vadd.f32 %v2487, %v2416
        %v2504 = vadd.f32 %v2488, %v2420
        %v2505 = vadd.f32 %v2489, %v2424
        %v2506 = vadd.f32 %v2490, %v2428
        %v2507 = vadd.f32 %v2491, %v2432
        %v2508 = vadd.f32 %v2492, %v2436
        %v2509 = vadd.f32 %v2493, %v2440
        %v2510 = vadd.f32 %v2494, %v2444
        %v2511 = vadd.f32 %v2495, %v2448
        %v2512 = vadd.f32 %v2496, %v2452
        %v2513 = vadd.f32 %v2497, %v2456
        %v2514 = vadd.f32 %v2498, %v2460
        %v2515 = vadd.f32 %v2499, %v2464
        %v2516 = vadd.f32 %v2500, %v2468
        %v2517 = vld [vmem:[#allocation2] sm:$0xff]
        %v2518 = vld [vmem:[#allocation2 + $0x8] sm:$0xff]
        %v2519 = vld [vmem:[#allocation2 + $0x10] sm:$0xff]
        %v2520 = vld [vmem:[#allocation2 + $0x18] sm:$0xff]
        %v2521 = vld [vmem:[#allocation2 + $0x20] sm:$0xff]
        %v2522 = vld [vmem:[#allocation2 + $0x28] sm:$0xff]
        %v2523 = vld [vmem:[#allocation2 + $0x30] sm:$0xff]
        %v2524 = vld [vmem:[#allocation2 + $0x38] sm:$0xff]
        %v2525 = vld [vmem:[#allocation2 + $0x40] sm:$0xff]
        %v2526 = vld [vmem:[#allocation2 + $0x48] sm:$0xff]
        %v2527 = vld [vmem:[#allocation2 + $0x50] sm:$0xff]
        %v2528 = vld [vmem:[#allocation2 + $0x58] sm:$0xff]
        %v2529 = vld [vmem:[#allocation2 + $0x60] sm:$0xff]
        %v2530 = vld [vmem:[#allocation2 + $0x68] sm:$0xff]
        %v2531 = vld [vmem:[#allocation2 + $0x70] sm:$0xff]
        %v2532 = vld [vmem:[#allocation2 + $0x78] sm:$0xff]
        %v2533 = vadd.f32 %v2517, %v2501
        %v2534 = vadd.f32 %v2518, %v2502
        %v2535 = vadd.f32 %v2519, %v2503
        %v2536 = vadd.f32 %v2520, %v2504
        %v2537 = vadd.f32 %v2521, %v2505
        %v2538 = vadd.f32 %v2522, %v2506
        %v2539 = vadd.f32 %v2523, %v2507
        %v2540 = vadd.f32 %v2524, %v2508
        %v2541 = vadd.f32 %v2525, %v2509
        %v2542 = vadd.f32 %v2526, %v2510
        %v2543 = vadd.f32 %v2527, %v2511
        %v2544 = vadd.f32 %v2528, %v2512
        %v2545 = vadd.f32 %v2529, %v2513
        %v2546 = vadd.f32 %v2530, %v2514
        %v2547 = vadd.f32 %v2531, %v2515
        %v2548 = vadd.f32 %v2532, %v2516
        %2549 = vst [vmem:[#allocation2] sm:$0xff] %v2533
        %2550 = vst [vmem:[#allocation2 + $0x8] sm:$0xff] %v2534
        %2551 = vst [vmem:[#allocation2 + $0x10] sm:$0xff] %v2535
        %2552 = vst [vmem:[#allocation2 + $0x18] sm:$0xff] %v2536
        %2553 = vst [vmem:[#allocation2 + $0x20] sm:$0xff] %v2537
        %2554 = vst [vmem:[#allocation2 + $0x28] sm:$0xff] %v2538
        %2555 = vst [vmem:[#allocation2 + $0x30] sm:$0xff] %v2539
        %2556 = vst [vmem:[#allocation2 + $0x38] sm:$0xff] %v2540
        %2557 = vst [vmem:[#allocation2 + $0x40] sm:$0xff] %v2541
        %2558 = vst [vmem:[#allocation2 + $0x48] sm:$0xff] %v2542
        %2559 = vst [vmem:[#allocation2 + $0x50] sm:$0xff] %v2543
        %2560 = vst [vmem:[#allocation2 + $0x58] sm:$0xff] %v2544
        %2561 = vst [vmem:[#allocation2 + $0x60] sm:$0xff] %v2545
        %2562 = vst [vmem:[#allocation2 + $0x68] sm:$0xff] %v2546
        %2563 = vst [vmem:[#allocation2 + $0x70] sm:$0xff] %v2547
        %2564 = vst [vmem:[#allocation2 + $0x78] sm:$0xff] %v2548
        // Predicated region
        $region45: #{tpu_custom_call.1} parent=39 // pred_check
          %p2565 = pneg %p264
        $region46: #{tpu_custom_call.1} parent=39 // pred_check_branch
          %2567 = sbr.rel (%p2565) target = $region48
        $region47: #{tpu_custom_call.1} parent=39 // pred_region
          %v2568 = vld [vmem:[#allocation2] sm:$0xff]
          %v2569 = vld [vmem:[#allocation2 + $0x8] sm:$0xff]
          %v2570 = vld [vmem:[#allocation2 + $0x10] sm:$0xff]
          %v2571 = vld [vmem:[#allocation2 + $0x18] sm:$0xff]
          %v2572 = vld [vmem:[#allocation2 + $0x20] sm:$0xff]
          %v2573 = vld [vmem:[#allocation2 + $0x28] sm:$0xff]
          %v2574 = vld [vmem:[#allocation2 + $0x30] sm:$0xff]
          %v2575 = vld [vmem:[#allocation2 + $0x38] sm:$0xff]
          %v2576 = vld [vmem:[#allocation2 + $0x40] sm:$0xff]
          %v2577 = vld [vmem:[#allocation2 + $0x48] sm:$0xff]
          %v2578 = vld [vmem:[#allocation2 + $0x50] sm:$0xff]
          %v2579 = vld [vmem:[#allocation2 + $0x58] sm:$0xff]
          %v2580 = vld [vmem:[#allocation2 + $0x60] sm:$0xff]
          %v2581 = vld [vmem:[#allocation2 + $0x68] sm:$0xff]
          %v2582 = vld [vmem:[#allocation2 + $0x70] sm:$0xff]
          %v2583 = vld [vmem:[#allocation2 + $0x78] sm:$0xff]
          %2584 = vadd.xlane.f32.xlu0 %v2568
          %v2585 = vpop.xlane.xlu0 %2584
          %2586 = vadd.xlane.f32.xlu0 %v2569
          %v2587 = vpop.xlane.xlu0 %2586
          %2588 = vadd.xlane.f32.xlu0 %v2570
          %v2589 = vpop.xlane.xlu0 %2588
          %2590 = vadd.xlane.f32.xlu0 %v2571
          %v2591 = vpop.xlane.xlu0 %2590
          %2592 = vadd.xlane.f32.xlu0 %v2572
          %v2593 = vpop.xlane.xlu0 %2592
          %2594 = vadd.xlane.f32.xlu0 %v2573
          %v2595 = vpop.xlane.xlu0 %2594
          %2596 = vadd.xlane.f32.xlu0 %v2574
          %v2597 = vpop.xlane.xlu0 %2596
          %2598 = vadd.xlane.f32.xlu0 %v2575
          %v2599 = vpop.xlane.xlu0 %2598
          %2600 = vadd.xlane.f32.xlu0 %v2576
          %v2601 = vpop.xlane.xlu0 %2600
          %2602 = vadd.xlane.f32.xlu0 %v2577
          %v2603 = vpop.xlane.xlu0 %2602
          %2604 = vadd.xlane.f32.xlu0 %v2578
          %v2605 = vpop.xlane.xlu0 %2604
          %2606 = vadd.xlane.f32.xlu0 %v2579
          %v2607 = vpop.xlane.xlu0 %2606
          %2608 = vadd.xlane.f32.xlu0 %v2580
          %v2609 = vpop.xlane.xlu0 %2608
          %2610 = vadd.xlane.f32.xlu0 %v2581
          %v2611 = vpop.xlane.xlu0 %2610
          %2612 = vadd.xlane.f32.xlu0 %v2582
          %v2613 = vpop.xlane.xlu0 %2612
          %2614 = vadd.xlane.f32.xlu0 %v2583
          %v2615 = vpop.xlane.xlu0 %2614
          %v2616 = vmul.f32 %v2585, 0.0009765625
          %v2617 = vmul.f32 %v2587, 0.0009765625
          %v2618 = vmul.f32 %v2589, 0.0009765625
          %v2619 = vmul.f32 %v2591, 0.0009765625
          %v2620 = vmul.f32 %v2593, 0.0009765625
          %v2621 = vmul.f32 %v2595, 0.0009765625
          %v2622 = vmul.f32 %v2597, 0.0009765625
          %v2623 = vmul.f32 %v2599, 0.0009765625
          %v2624 = vmul.f32 %v2601, 0.0009765625
          %v2625 = vmul.f32 %v2603, 0.0009765625
          %v2626 = vmul.f32 %v2605, 0.0009765625
          %v2627 = vmul.f32 %v2607, 0.0009765625
          %v2628 = vmul.f32 %v2609, 0.0009765625
          %v2629 = vmul.f32 %v2611, 0.0009765625
          %v2630 = vmul.f32 %v2613, 0.0009765625
          %v2631 = vmul.f32 %v2615, 0.0009765625
          %v2632 = vlog2.pop %v2616
          %v2633 = vmul.f32 %v2632, 0.6931472
          %v2634 = vlog2.pop %v2617
          %v2635 = vmul.f32 %v2634, 0.6931472
          %v2636 = vlog2.pop %v2618
          %v2637 = vmul.f32 %v2636, 0.6931472
          %v2638 = vlog2.pop %v2619
          %v2639 = vmul.f32 %v2638, 0.6931472
          %v2640 = vlog2.pop %v2620
          %v2641 = vmul.f32 %v2640, 0.6931472
          %v2642 = vlog2.pop %v2621
          %v2643 = vmul.f32 %v2642, 0.6931472
          %v2644 = vlog2.pop %v2622
          %v2645 = vmul.f32 %v2644, 0.6931472
          %v2646 = vlog2.pop %v2623
          %v2647 = vmul.f32 %v2646, 0.6931472
          %v2648 = vlog2.pop %v2624
          %v2649 = vmul.f32 %v2648, 0.6931472
          %v2650 = vlog2.pop %v2625
          %v2651 = vmul.f32 %v2650, 0.6931472
          %v2652 = vlog2.pop %v2626
          %v2653 = vmul.f32 %v2652, 0.6931472
          %v2654 = vlog2.pop %v2627
          %v2655 = vmul.f32 %v2654, 0.6931472
          %v2656 = vlog2.pop %v2628
          %v2657 = vmul.f32 %v2656, 0.6931472
          %v2658 = vlog2.pop %v2629
          %v2659 = vmul.f32 %v2658, 0.6931472
          %v2660 = vlog2.pop %v2630
          %v2661 = vmul.f32 %v2660, 0.6931472
          %v2662 = vlog2.pop %v2631
          %v2663 = vmul.f32 %v2662, 0.6931472
          %v2664 = vmul.f32 %v2633, 0.33333334
          %v2665 = vmul.f32 %v2635, 0.33333334
          %v2666 = vmul.f32 %v2637, 0.33333334
          %v2667 = vmul.f32 %v2639, 0.33333334
          %v2668 = vmul.f32 %v2641, 0.33333334
          %v2669 = vmul.f32 %v2643, 0.33333334
          %v2670 = vmul.f32 %v2645, 0.33333334
          %v2671 = vmul.f32 %v2647, 0.33333334
          %v2672 = vmul.f32 %v2649, 0.33333334
          %v2673 = vmul.f32 %v2651, 0.33333334
          %v2674 = vmul.f32 %v2653, 0.33333334
          %v2675 = vmul.f32 %v2655, 0.33333334
          %v2676 = vmul.f32 %v2657, 0.33333334
          %v2677 = vmul.f32 %v2659, 0.33333334
          %v2678 = vmul.f32 %v2661, 0.33333334
          %v2679 = vmul.f32 %v2663, 0.33333334
          %v2680 = vmul.f32 %v2664, 1.442695
          %v2681 = vpow.pop %v2680
          %v2682 = vmul.f32 %v2665, 1.442695
          %v2683 = vpow.pop %v2682
          %v2684 = vmul.f32 %v2666, 1.442695
          %v2685 = vpow.pop %v2684
          %v2686 = vmul.f32 %v2667, 1.442695
          %v2687 = vpow.pop %v2686
          %v2688 = vmul.f32 %v2668, 1.442695
          %v2689 = vpow.pop %v2688
          %v2690 = vmul.f32 %v2669, 1.442695
          %v2691 = vpow.pop %v2690
          %v2692 = vmul.f32 %v2670, 1.442695
          %v2693 = vpow.pop %v2692
          %v2694 = vmul.f32 %v2671, 1.442695
          %v2695 = vpow.pop %v2694
          %v2696 = vmul.f32 %v2672, 1.442695
          %v2697 = vpow.pop %v2696
          %v2698 = vmul.f32 %v2673, 1.442695
          %v2699 = vpow.pop %v2698
          %v2700 = vmul.f32 %v2674, 1.442695
          %v2701 = vpow.pop %v2700
          %v2702 = vmul.f32 %v2675, 1.442695
          %v2703 = vpow.pop %v2702
          %v2704 = vmul.f32 %v2676, 1.442695
          %v2705 = vpow.pop %v2704
          %v2706 = vmul.f32 %v2677, 1.442695
          %v2707 = vpow.pop %v2706
          %v2708 = vmul.f32 %v2678, 1.442695
          %v2709 = vpow.pop %v2708
          %v2710 = vmul.f32 %v2679, 1.442695
          %v2711 = vpow.pop %v2710
          %v2712 = vld [vmem:[%s3] sm:$0xff]
          %v2713 = vld [vmem:[%s3 + $0x8] sm:$0xff]
          %v2714 = vld [vmem:[%s3 + $0x10] sm:$0xff]
          %v2715 = vld [vmem:[%s3 + $0x18] sm:$0xff]
          %v2716 = vld [vmem:[%s3 + $0x20] sm:$0xff]
          %v2717 = vld [vmem:[%s3 + $0x28] sm:$0xff]
          %v2718 = vld [vmem:[%s3 + $0x30] sm:$0xff]
          %v2719 = vld [vmem:[%s3 + $0x38] sm:$0xff]
          %v2720 = vld [vmem:[%s3 + $0x40] sm:$0xff]
          %v2721 = vld [vmem:[%s3 + $0x48] sm:$0xff]
          %v2722 = vld [vmem:[%s3 + $0x50] sm:$0xff]
          %v2723 = vld [vmem:[%s3 + $0x58] sm:$0xff]
          %v2724 = vld [vmem:[%s3 + $0x60] sm:$0xff]
          %v2725 = vld [vmem:[%s3 + $0x68] sm:$0xff]
          %v2726 = vld [vmem:[%s3 + $0x70] sm:$0xff]
          %v2727 = vld [vmem:[%s3 + $0x78] sm:$0xff]
          %v2728 = vmul.f32 %v2681, %v2712
          %v2729 = vmul.f32 %v2683, %v2713
          %v2730 = vmul.f32 %v2685, %v2714
          %v2731 = vmul.f32 %v2687, %v2715
          %v2732 = vmul.f32 %v2689, %v2716
          %v2733 = vmul.f32 %v2691, %v2717
          %v2734 = vmul.f32 %v2693, %v2718
          %v2735 = vmul.f32 %v2695, %v2719
          %v2736 = vmul.f32 %v2697, %v2720
          %v2737 = vmul.f32 %v2699, %v2721
          %v2738 = vmul.f32 %v2701, %v2722
          %v2739 = vmul.f32 %v2703, %v2723
          %v2740 = vmul.f32 %v2705, %v2724
          %v2741 = vmul.f32 %v2707, %v2725
          %v2742 = vmul.f32 %v2709, %v2726
          %v2743 = vmul.f32 %v2711, %v2727
          %vm2744 = vcmask 48128
          %v2745 = vsel %vm2744, %v2728, 0.0
          %v2746 = vsel %vm2744, %v2729, 0.0
          %v2747 = vadd.f32 %v2745, %v2746
          %v2748 = vsel %vm2744, %v2730, 0.0
          %v2749 = vadd.f32 %v2747, %v2748
          %v2750 = vsel %vm2744, %v2731, 0.0
          %v2751 = vadd.f32 %v2749, %v2750
          %v2752 = vsel %vm2744, %v2732, 0.0
          %v2753 = vadd.f32 %v2751, %v2752
          %v2754 = vsel %vm2744, %v2733, 0.0
          %v2755 = vadd.f32 %v2753, %v2754
          %v2756 = vsel %vm2744, %v2734, 0.0
          %v2757 = vadd.f32 %v2755, %v2756
          %v2758 = vsel %vm2744, %v2735, 0.0
          %v2759 = vadd.f32 %v2757, %v2758
          %v2760 = vsel %vm2744, %v2736, 0.0
          %v2761 = vadd.f32 %v2759, %v2760
          %v2762 = vsel %vm2744, %v2737, 0.0
          %v2763 = vadd.f32 %v2761, %v2762
          %v2764 = vsel %vm2744, %v2738, 0.0
          %v2765 = vadd.f32 %v2763, %v2764
          %v2766 = vsel %vm2744, %v2739, 0.0
          %v2767 = vadd.f32 %v2765, %v2766
          %v2768 = vsel %vm2744, %v2740, 0.0
          %v2769 = vadd.f32 %v2767, %v2768
          %v2770 = vsel %vm2744, %v2741, 0.0
          %v2771 = vadd.f32 %v2769, %v2770
          %v2772 = vsel %vm2744, %v2742, 0.0
          %v2773 = vadd.f32 %v2771, %v2772
          %v2774 = vsel %vm2744, %v2743, 0.0
          %v2775 = vadd.f32 %v2773, %v2774
          %v2776 = vrot.slane %v2775, 4
          %v2777 = vadd.f32 %v2775, %v2776
          %v2778 = vrot.slane %v2777, 2
          %v2779 = vadd.f32 %v2777, %v2778
          %v2780 = vrot.slane %v2779, 1
          %v2781 = vadd.f32 %v2779, %v2780
          %v2782 = vld [vmem:[%s263] sm:$0x1]
          %v2783 = vadd.f32 %v2781, %v2782
          %vm2784 = vcmask 40960
          %2785 = vst.msk [vmem:[%s250] sm:$0x1] %vm2784, %v2783
        $region48: #{tpu_custom_call.1} parent=39 // pred_fallthru
          _
        %s2786 = sand.u32 %s156, 1
        %s2787 = scalar_lea.sflag [#allocation4], %s2786
        %s2788 = sand.u32 %s156, 1
        %s2789 = scalar_lea.vmem [#allocation3], %s2788
        // Predicated region
        $region49: #{tpu_custom_call.1} parent=39 // pred_check
          %p2790 = pneg %p166
        $region50: #{tpu_custom_call.1} parent=39 // pred_check_branch
          %2792 = sbr.rel (%p2790) target = $region52
        $region51: #{tpu_custom_call.1} parent=39 // pred_region
          %s2794 = ssub.s32 16, 16
          %2795 = vsyncadd %s2787, %s2794
          %s2796 = smul.addr %s23, 16
          %s2797 = scalar_lea.hbm %s5, %s2796
          %s2799 = sshll.u32 %s2789, 4
          %s2800 = int_to_ptr.vmem [resolvable:$true] %s2799
          %2802 = dma.vmem_to_hbm [thread:$0]  %s2800, 16, %s2797, %s2787
        $region52: #{tpu_custom_call.1} parent=39 // pred_fallthru
          _
      $region40: #{tpu_custom_call.1} parent=5 // pred_fallthru
        _
      %p2803 = scmp.le.s32.totalorder 2, %s14
      // Predicated region
      $region53: #{tpu_custom_call.1} parent=5 // pred_check
        %p2804 = pneg %p2803
      $region54: #{tpu_custom_call.1} parent=5 // pred_check_branch
        %2806 = sbr.rel (%p2804) target = $region56
      $region55: #{tpu_custom_call.1} parent=5 // pred_region
        %s2807 = ssub.s32 %s14, 2
        // Predicated region
        $region57: #{tpu_custom_call.1} parent=55 // pred_check
          %p2808 = pneg %p172
        $region58: #{tpu_custom_call.1} parent=55 // pred_check_branch
          %2810 = sbr.rel (%p2808) target = $region60
        $region59: #{tpu_custom_call.1} parent=55 // pred_region
          %s2811 = sand.u32 %s157, 1
          %s2812 = scalar_lea.sflag [#allocation4], %s2811
          %s2813 = sand.u32 %s157, 1
          %s2814 = scalar_lea.vmem [#allocation3], %s2813
          %2815 = dma.done %s2812, 16
        $region60: #{tpu_custom_call.1} parent=55 // pred_fallthru
          _
      $region56: #{tpu_custom_call.1} parent=5 // pred_fallthru
        _
    $region6: #{tpu_custom_call.1} parent=1 // loop_footer
      %s18 = sadd.s32 1, %s14
    $region7: #{tpu_custom_call.1} parent=1 // loop_footer_branch
      %13 = sbr.rel target = $region3
    $region8: #{tpu_custom_call.1} parent=1 // loop_exit
      _
    %2816 = vsyncpa [#allocation4], 1
    %s2817 = scalar_lea.sflag [#allocation4], 1
    %2818 = vsyncpa %s2817, 1

</llo_original>
